<compile_context>
chip_gen: v5e
topology: v5e:2x2
jax: 0.10.0
libtpu: 0.0.40
codegen_flags: <defaults>
</compile_context>

<pallas_src>
import jax
import jax.numpy as jnp
from jax.experimental import pallas as pl
from jax.experimental.pallas import tpu as pltpu

LANE = 128       # lane tile (last dim)
SUBLANE = 8      # sublane tile (second-to-last dim, f32)
NEG_INF = -1e30
W_O_BUF_BYTES = 2 << 20   # ~2 MiB per streaming w_o buffer; TODO(synk): re-derive per TPU generation (v7x: 64 MiB VMEM)


def _round_up(x, m):
    return (x + m - 1) // m * m


def _pad_to(a, shape, value=0.0):
    pads = [(0, t - s) for s, t in zip(a.shape, shape)]
    return jnp.pad(a, pads, constant_values=value)


def _choose_tile_v(Hp, Vp_hint):
    """Vocab tile so a bf16 (Hp, TILE_V) w_o block stays ~W_O_BUF_BYTES per buffer."""
    tile = max(LANE, (W_O_BUF_BYTES // (Hp * 2)) // LANE * LANE)
    return min(tile, Vp_hint)


def luong_decoder_kernel(
    x_ref,          # (Bp, Hp)      f32  embedded input step (H-padded)       [resident]
    h_ref,          # (Bp, Hp)      f32  previous hidden state                [resident]
    enc_ref,        # (Bp, Lp, Hp)  bf16 encoder outputs, batch-major, padded [resident]
    attn_bias_ref,  # (1, Lp)       f32  0 for valid L, -1e30 for padding     [resident]
    w_ih_ref,       # (Hp, 3Hp)     bf16 fused input-to-gate weights [r|z|n]  [resident]
    w_hh_ref,       # (Hp, 3Hp)     bf16 fused hidden-to-gate weights         [resident]
    b_ih_ref,       # (1, 3Hp)      f32                                       [resident]
    b_hh_ref,       # (1, 3Hp)      f32                                       [resident]
    wc_h_ref,       # (Hp, Hp)      bf16 concat-linear weight, rnn_out half   [resident]
    wc_c_ref,       # (Hp, Hp)      bf16 concat-linear weight, context half   [resident]
    b_c_ref,        # (1, Hp)       f32                                       [resident]
    w_o_ref,        # (Hp, TILE_V)  bf16 output projection tile               [streamed]
    b_o_ref,        # (1, TILE_V)   f32  (-1e30 on padded vocab columns)      [streamed]
    out_ref,        # (Bp, TILE_V)  f32  exp(logits - tile_max), unnormalized
    m_ref,          # (Bp, LANE)    f32  per-tile row max (lane-broadcast)
    hid_ref,        # (Bp, Hp)      f32  new hidden state                     [resident output]
    cat_scratch,    # (Bp, Hp)      bf16 tanh(concat) stash across vocab tiles
):
    j = pl.program_id(0)
    Hp = h_ref.shape[-1]

    # ---- GRU step + dot attention + concat-Linear: only on the first vocab tile ----
    @pl.when(j == 0)
    def _():
        x = x_ref[...]
        h = h_ref[...]
        # fused gate matmuls (PyTorch gate order r, z, n)
        xi = jnp.dot(x.astype(jnp.bfloat16), w_ih_ref[...],
                     preferred_element_type=jnp.float32) + b_ih_ref[...]      # (Bp, 3Hp)
        hh = jnp.dot(h.astype(jnp.bfloat16), w_hh_ref[...],
                     preferred_element_type=jnp.float32) + b_hh_ref[...]      # (Bp, 3Hp)
        r = jax.nn.sigmoid(xi[:, 0:Hp] + hh[:, 0:Hp])
        z = jax.nn.sigmoid(xi[:, Hp:2 * Hp] + hh[:, Hp:2 * Hp])
        n = jnp.tanh(xi[:, 2 * Hp:3 * Hp] + r * hh[:, 2 * Hp:3 * Hp])
        h_new = (1.0 - z) * n + z * h                                         # (Bp, Hp) f32
        hid_ref[...] = h_new

        # dot attention: small Lp -> VPU multiply + reduce (no Bp serialized M=1 MXU matmuls)
        enc = enc_ref[...].astype(jnp.float32)                                # (Bp, Lp, Hp)
        scores = jnp.sum(h_new[:, None, :] * enc, axis=-1) + attn_bias_ref[...]   # (Bp, Lp)
        scores = scores - jnp.max(scores, axis=-1, keepdims=True)
        es = jnp.exp(scores)
        attn = es / jnp.sum(es, axis=-1, keepdims=True)                       # (Bp, Lp)
        context = jnp.sum(attn[:, :, None] * enc, axis=1)                     # (Bp, Hp) f32

        # concat([rnn_out, context]) @ Wc == rnn_out @ Wc_h + context @ Wc_c  (no VMEM concat copy)
        concat_out = jnp.tanh(
            jnp.dot(h_new.astype(jnp.bfloat16), wc_h_ref[...],
                    preferred_element_type=jnp.float32)
            + jnp.dot(context.astype(jnp.bfloat16), wc_c_ref[...],
                      preferred_element_type=jnp.float32)
            + b_c_ref[...])                                                   # (Bp, Hp)
        cat_scratch[...] = concat_out.astype(jnp.bfloat16)

    # ---- per-vocab-tile projection + partial (split-V) softmax ----
    logits = jnp.dot(cat_scratch[...], w_o_ref[...],
                     preferred_element_type=jnp.float32) + b_o_ref[...]       # (Bp, TILE_V)
    m_j = jnp.max(logits, axis=-1, keepdims=True)                             # (Bp, 1)
    out_ref[...] = jnp.exp(logits - m_j)     # padded vocab cols carry -1e30 bias -> exp ~ 0
    m_ref[...] = jnp.broadcast_to(m_j, m_ref.shape)


def luong_attn_decoder_forward(params, input_step, last_hidden, encoder_outputs):
    """Forward pass of LuongAttnDecoderRNN ('dot' attention, n_layers=1, eval mode).

    input_step:      (1, B) int32
    last_hidden:     (1, B, H) float32
    encoder_outputs: (L, B, H) float32
    returns: (output (B, V) softmaxed over V, hidden (1, B, H))
    """
    B = input_step.shape[1]
    L = encoder_outputs.shape[0]
    H = last_hidden.shape[-1]
    V = params["embedding"].shape[0]
    Hp, Vp = params["w_o"].shape
    Bp = _round_up(B, SUBLANE)
    Lp = _round_up(L, SUBLANE)

    TILE_V = _choose_tile_v(Hp, Vp)
    while Vp % TILE_V:          # safety: TILE_V must divide the padded vocab
        TILE_V -= LANE
    NT = Vp // TILE_V

    # Embedding lookup (XLA gather glue); table already H-padded.
    embedded = params["embedding"][input_step[0]]                             # (B, Hp)
    # TODO(synk): embedding_dropout is identity in eval mode; training-mode dropout not implemented.

    x_p = _pad_to(embedded, (Bp, Hp))
    h_p = _pad_to(last_hidden[0], (Bp, Hp))
    # TODO(synk): in a multi-token decode loop, hoist this transpose/pad/cast out of the per-step path.
    enc_p = _pad_to(jnp.transpose(encoder_outputs, (1, 0, 2)), (Bp, Lp, Hp)).astype(jnp.bfloat16)
    attn_bias = _pad_to(jnp.zeros((1, L), jnp.float32), (1, Lp), value=NEG_INF)

    vmem = pl.BlockSpec(memory_space=pltpu.MemorySpace.VMEM)   # whole-array VMEM-resident operand

    # VMEM budget: resident operands + double-buffered streamed w_o/b_o + outputs + scratch (2x headroom)
    bf2, f4 = 2, 4
    resident = (2 * Bp * Hp * f4 + Bp * Lp * Hp * bf2 + Lp * f4
                + 2 * (Hp * 3 * Hp) * bf2 + 2 * (3 * Hp) * f4
                + 2 * (Hp * Hp) * bf2 + Hp * f4)
    streamed = 2 * (Hp * TILE_V * bf2 + TILE_V * f4)
    outs = 2 * (Bp * TILE_V * f4 + Bp * LANE * f4) + 2 * Bp * Hp * f4
    scratch = Bp * Hp * bf2
    vmem_limit = int(min(100 << 20, max(32 << 20, 2 * (resident + streamed + outs + scratch))))

    out_e, m_out, hid_p = pl.pallas_call(
        luong_decoder_kernel,
        grid=(NT,),
        out_shape=(
            jax.ShapeDtypeStruct((Bp, Vp), jnp.float32),          # exp(logits - tile max)
            jax.ShapeDtypeStruct((Bp, NT * LANE), jnp.float32),   # per-tile max (lane-broadcast)
            jax.ShapeDtypeStruct((Bp, Hp), jnp.float32),          # new hidden state
        ),
        in_specs=[
            vmem, vmem, vmem, vmem,                               # x, h, enc, attn_bias
            vmem, vmem, vmem, vmem,                               # w_ih, w_hh, b_ih, b_hh
            vmem, vmem, vmem,                                     # wc_h, wc_c, b_c
            pl.BlockSpec((Hp, TILE_V), lambda j: (0, j)),         # w_o: streamed, double-buffered
            pl.BlockSpec((1, TILE_V), lambda j: (0, j)),          # b_o: streamed
        ],
        out_specs=(
            pl.BlockSpec((Bp, TILE_V), lambda j: (0, j)),
            pl.BlockSpec((Bp, LANE), lambda j: (0, j)),
            pl.BlockSpec((Bp, Hp), lambda j: (0, 0)),             # resident across the vocab axis
        ),
        scratch_shapes=[pltpu.VMEM((Bp, Hp), jnp.bfloat16)],
        compiler_params=pltpu.CompilerParams(
            dimension_semantics=("arbitrary",),
            vmem_limit_bytes=vmem_limit),
    )(
        x_p, h_p, enc_p, attn_bias,
        params["w_ih"], params["w_hh"], params["b_ih"], params["b_hh"],
        params["wc_h"], params["wc_c"], params["b_c"],
        params["w_o"], params["b_o"],
    )

    # Cross-tile softmax combine (tiny (Bp, NT) stats). Fully-padded vocab tiles get scale = 0,
    # mixed tiles already have ~0 mass on padded columns via the -1e30 bias -> exact softmax.
    m_t = m_out.reshape(Bp, NT, LANE)[:, :, 0]                    # (Bp, NT)
    m_glob = jnp.max(m_t, axis=1, keepdims=True)                  # (Bp, 1)
    scale = jnp.exp(m_t - m_glob)                                 # (Bp, NT)
    e = out_e.reshape(Bp, NT, TILE_V) * scale[:, :, None]
    probs = (e / jnp.sum(e, axis=(1, 2), keepdims=True)).reshape(Bp, Vp)

    output = probs[:B, :V]             # padded vocab columns carry exactly 0 mass
    hidden = hid_p[None, :B, :H]       # (1, B, H)
    return output, hidden


def init_params(key, hidden_size, output_size):
    """PyTorch-equivalent init, then pack/pad/cast to the kernel's fused layouts (done once)."""
    H, V = hidden_size, output_size
    Hp = _round_up(H, LANE)
    TILE_V = _choose_tile_v(Hp, _round_up(V, LANE))
    Vp = _round_up(V, TILE_V)
    ks = jax.random.split(key, 9)
    u = lambda k, shape, s: jax.random.uniform(k, shape, jnp.float32, -s, s)

    s_gru = 1.0 / (H ** 0.5)
    w_ih = u(ks[0], (3 * H, H), s_gru)     # weight_ih_l0, gate order r,z,n
    w_hh = u(ks[1], (3 * H, H), s_gru)     # weight_hh_l0
    b_ih = u(ks[2], (3 * H,), s_gru)
    b_hh = u(ks[3], (3 * H,), s_gru)

    emb = jax.random.normal(ks[4], (V, H), jnp.float32)

    s_c = 1.0 / ((2 * H) ** 0.5)
    w_c = u(ks[5], (H, 2 * H), s_c)        # concat.weight
    b_c = u(ks[6], (H,), s_c)

    s_o = 1.0 / (H ** 0.5)
    w_o = u(ks[7], (V, H), s_o)            # out.weight
    b_o = u(ks[8], (V,), s_o)

    def pack_gate_weights(w):              # (3H, H) -> (Hp, 3Hp), per-gate transpose + pad
        blocks = [_pad_to(w[g * H:(g + 1) * H].T, (Hp, Hp)) for g in range(3)]
        return jnp.concatenate(blocks, axis=1)

    def pack_gate_bias(b):                 # (3H,) -> (1, 3Hp)
        blocks = [_pad_to(b[g * H:(g + 1) * H].reshape(1, H), (1, Hp)) for g in range(3)]
        return jnp.concatenate(blocks, axis=1)

    return {
        "embedding": _pad_to(emb, (V, Hp)),                                   # f32, H-padded
        "w_ih": pack_gate_weights(w_ih).astype(jnp.bfloat16),                 # (Hp, 3Hp)
        "w_hh": pack_gate_weights(w_hh).astype(jnp.bfloat16),                 # (Hp, 3Hp)
        "b_ih": pack_gate_bias(b_ih),                                         # (1, 3Hp) f32
        "b_hh": pack_gate_bias(b_hh),                                         # (1, 3Hp) f32
        "wc_h": _pad_to(w_c[:, :H].T, (Hp, Hp)).astype(jnp.bfloat16),         # (Hp, Hp)
        "wc_c": _pad_to(w_c[:, H:].T, (Hp, Hp)).astype(jnp.bfloat16),         # (Hp, Hp)
        "b_c": _pad_to(b_c.reshape(1, H), (1, Hp)),                           # (1, Hp) f32
        "w_o": _pad_to(w_o.T, (Hp, Vp)).astype(jnp.bfloat16),                 # (Hp, Vp)
        "b_o": _pad_to(b_o.reshape(1, V), (1, Vp), value=NEG_INF),            # (1, Vp) f32
    }


if __name__ == "__main__":
    B, H, L, V = 2, 32, 8, 64   # batch, hidden, encoder seq len, vocab (output_size)

    key = jax.random.PRNGKey(0)
    kp, k1, k2, k3 = jax.random.split(key, 4)

    params = init_params(kp, H, V)

    input_step = jax.random.randint(k1, (1, B), 0, V, dtype=jnp.int32)        # (1, B)
    last_hidden = jax.random.normal(k2, (1, B, H), jnp.float32)               # (n_layers=1, B, H)
    encoder_outputs = jax.random.normal(k3, (L, B, H), jnp.float32)           # (L, B, H)

    output, hidden = jax.jit(luong_attn_decoder_forward)(
        params, input_step, last_hidden, encoder_outputs)
    jax.block_until_ready((output, hidden))

    assert output.shape == (B, V) and hidden.shape == (1, B, H)
    # output rows are probability distributions
    assert bool(jnp.allclose(jnp.sum(output, axis=1), 1.0, atol=1e-5))
    print("KERNEL_OK")
</pallas_src>

<mosaic_0001>
module attributes {stable_mosaic.version = 11 : i64} {
  func.func @luong_decoder_kernel(%arg0: i32, %arg1: memref<8x128xf32, #tpu.memory_space<vmem>>, %arg2: memref<8x128xf32, #tpu.memory_space<vmem>>, %arg3: memref<8x8x128xbf16, #tpu.memory_space<vmem>>, %arg4: memref<1x8xf32, #tpu.memory_space<vmem>>, %arg5: memref<128x384xbf16, #tpu.memory_space<vmem>>, %arg6: memref<128x384xbf16, #tpu.memory_space<vmem>>, %arg7: memref<1x384xf32, #tpu.memory_space<vmem>>, %arg8: memref<1x384xf32, #tpu.memory_space<vmem>>, %arg9: memref<128x128xbf16, #tpu.memory_space<vmem>>, %arg10: memref<128x128xbf16, #tpu.memory_space<vmem>>, %arg11: memref<1x128xf32, #tpu.memory_space<vmem>>, %arg12: memref<128x128xbf16, #tpu.memory_space<vmem>>, %arg13: memref<1x128xf32, #tpu.memory_space<vmem>>, %arg14: memref<8x128xf32, #tpu.memory_space<vmem>>, %arg15: memref<8x128xf32, #tpu.memory_space<vmem>>, %arg16: memref<8x128xf32, #tpu.memory_space<vmem>>, %arg17: memref<8x128xbf16, #tpu.memory_space<vmem>>) attributes {dimension_semantics = [#tpu.dimension_semantics<arbitrary>], iteration_bounds = array<i64: 1>, scalar_prefetch = 0 : i64, scratch_operands = 1 : i64, tpu.core_type = #tpu.core_type<tc>, window_params = [{pipeline_mode = #tpu.pipeline_mode<synchronous>, transform_indices = @transform_0, window_bounds = array<i64: 8, 128>}, {pipeline_mode = #tpu.pipeline_mode<synchronous>, transform_indices = @transform_1, window_bounds = array<i64: 8, 128>}, {pipeline_mode = #tpu.pipeline_mode<synchronous>, transform_indices = @transform_2, window_bounds = array<i64: 8, 8, 128>}, {pipeline_mode = #tpu.pipeline_mode<synchronous>, transform_indices = @transform_3, window_bounds = array<i64: 1, 8>}, {pipeline_mode = #tpu.pipeline_mode<synchronous>, transform_indices = @transform_4, window_bounds = array<i64: 128, 384>}, {pipeline_mode = #tpu.pipeline_mode<synchronous>, transform_indices = @transform_5, window_bounds = array<i64: 128, 384>}, {pipeline_mode = #tpu.pipeline_mode<synchronous>, transform_indices = @transform_6, window_bounds = array<i64: 1, 384>}, {pipeline_mode = #tpu.pipeline_mode<synchronous>, transform_indices = @transform_7, window_bounds = array<i64: 1, 384>}, {pipeline_mode = #tpu.pipeline_mode<synchronous>, transform_indices = @transform_8, window_bounds = array<i64: 128, 128>}, {pipeline_mode = #tpu.pipeline_mode<synchronous>, transform_indices = @transform_9, window_bounds = array<i64: 128, 128>}, {pipeline_mode = #tpu.pipeline_mode<synchronous>, transform_indices = @transform_10, window_bounds = array<i64: 1, 128>}, {transform_indices = @transform_11, window_bounds = array<i64: 128, 128>}, {transform_indices = @transform_12, window_bounds = array<i64: 1, 128>}, {transform_indices = @transform_13, window_bounds = array<i64: 8, 128>}, {transform_indices = @transform_14, window_bounds = array<i64: 8, 128>}, {pipeline_mode = #tpu.pipeline_mode<synchronous>, transform_indices = @transform_15, window_bounds = array<i64: 8, 128>}]} {
    %c0_i32 = arith.constant 0 : i32
    %0 = arith.cmpi eq, %arg0, %c0_i32 : i32
    %1 = arith.extui %0 : i1 to i32
    %c0_i32_0 = arith.constant 0 : i32
    %2 = arith.cmpi ne, %1, %c0_i32_0 : i32
    scf.if %2 {
      %c0_11 = arith.constant 0 : index
      %c0_12 = arith.constant 0 : index
      %18 = vector.load %arg1[%c0_11, %c0_12] : memref<8x128xf32, #tpu.memory_space<vmem>>, vector<8x128xf32>
      %c0_13 = arith.constant 0 : index
      %c0_14 = arith.constant 0 : index
      %19 = vector.load %arg2[%c0_13, %c0_14] : memref<8x128xf32, #tpu.memory_space<vmem>>, vector<8x128xf32>
      %20 = arith.truncf %18 : vector<8x128xf32> to vector<8x128xbf16>
      %c0_15 = arith.constant 0 : index
      %c0_16 = arith.constant 0 : index
      %21 = vector.load %arg5[%c0_15, %c0_16] : memref<128x384xbf16, #tpu.memory_space<vmem>>, vector<128x384xbf16>
      %cst_17 = arith.constant dense<0.000000e+00> : vector<8x384xf32>
      %22 = tpu.matmul %20, %21, %cst_17 {dimension_numbers = #tpu.dot_dimension_numbers<[1], [0], [0], [1], [0, 0, 1, 1], [], []>} : vector<8x128xbf16>, vector<128x384xbf16>, vector<8x384xf32> -> vector<8x384xf32>
      %c0_18 = arith.constant 0 : index
      %c0_19 = arith.constant 0 : index
      %23 = vector.load %arg7[%c0_18, %c0_19] : memref<1x384xf32, #tpu.memory_space<vmem>>, vector<1x384xf32>
      %24 = vector.broadcast %23 : vector<1x384xf32> to vector<8x384xf32>
      %25 = arith.addf %22, %24 : vector<8x384xf32>
      %26 = arith.truncf %19 : vector<8x128xf32> to vector<8x128xbf16>
      %c0_20 = arith.constant 0 : index
      %c0_21 = arith.constant 0 : index
      %27 = vector.load %arg6[%c0_20, %c0_21] : memref<128x384xbf16, #tpu.memory_space<vmem>>, vector<128x384xbf16>
      %cst_22 = arith.constant dense<0.000000e+00> : vector<8x384xf32>
      %28 = tpu.matmul %26, %27, %cst_22 {dimension_numbers = #tpu.dot_dimension_numbers<[1], [0], [0], [1], [0, 0, 1, 1], [], []>} : vector<8x128xbf16>, vector<128x384xbf16>, vector<8x384xf32> -> vector<8x384xf32>
      %c0_23 = arith.constant 0 : index
      %c0_24 = arith.constant 0 : index
      %29 = vector.load %arg8[%c0_23, %c0_24] : memref<1x384xf32, #tpu.memory_space<vmem>>, vector<1x384xf32>
      %30 = vector.broadcast %29 : vector<1x384xf32> to vector<8x384xf32>
      %31 = arith.addf %28, %30 : vector<8x384xf32>
      %32 = vector.extract_strided_slice %25 {offsets = [0, 0], sizes = [8, 128], strides = [1, 1]} : vector<8x384xf32> to vector<8x128xf32>
      %33 = vector.extract_strided_slice %31 {offsets = [0, 0], sizes = [8, 128], strides = [1, 1]} : vector<8x384xf32> to vector<8x128xf32>
      %34 = arith.addf %32, %33 : vector<8x128xf32>
      %35 = arith.negf %34 : vector<8x128xf32>
      %36 = math.exp %35 : vector<8x128xf32>
      %cst_25 = arith.constant 1.000000e+00 : f32
      %37 = vector.broadcast %cst_25 : f32 to vector<8x128xf32>
      %38 = arith.addf %37, %36 : vector<8x128xf32>
      %39 = arith.divf %37, %38 : vector<8x128xf32>
      %40 = vector.extract_strided_slice %25 {offsets = [0, 128], sizes = [8, 128], strides = [1, 1]} : vector<8x384xf32> to vector<8x128xf32>
      %41 = vector.extract_strided_slice %31 {offsets = [0, 128], sizes = [8, 128], strides = [1, 1]} : vector<8x384xf32> to vector<8x128xf32>
      %42 = arith.addf %40, %41 : vector<8x128xf32>
      %43 = arith.negf %42 : vector<8x128xf32>
      %44 = math.exp %43 : vector<8x128xf32>
      %cst_26 = arith.constant 1.000000e+00 : f32
      %45 = vector.broadcast %cst_26 : f32 to vector<8x128xf32>
      %46 = arith.addf %45, %44 : vector<8x128xf32>
      %47 = arith.divf %45, %46 : vector<8x128xf32>
      %48 = vector.extract_strided_slice %25 {offsets = [0, 256], sizes = [8, 128], strides = [1, 1]} : vector<8x384xf32> to vector<8x128xf32>
      %49 = vector.extract_strided_slice %31 {offsets = [0, 256], sizes = [8, 128], strides = [1, 1]} : vector<8x384xf32> to vector<8x128xf32>
      %50 = arith.mulf %39, %49 : vector<8x128xf32>
      %51 = arith.addf %48, %50 : vector<8x128xf32>
      %52 = math.tanh %51 : vector<8x128xf32>
      %cst_27 = arith.constant 1.000000e+00 : f32
      %53 = vector.broadcast %cst_27 : f32 to vector<8x128xf32>
      %54 = arith.subf %53, %47 : vector<8x128xf32>
      %55 = arith.mulf %54, %52 : vector<8x128xf32>
      %56 = arith.mulf %47, %19 : vector<8x128xf32>
      %57 = arith.addf %55, %56 : vector<8x128xf32>
      %c0_28 = arith.constant 0 : index
      %c0_29 = arith.constant 0 : index
      %58 = vector.load %arg16[%c0_28, %c0_29] : memref<8x128xf32, #tpu.memory_space<vmem>>, vector<8x128xf32>
      tpu.vector_store %arg16[%c0_28, %c0_29], %57 {strides = array<i32>} : memref<8x128xf32, #tpu.memory_space<vmem>>, vector<8x128xf32>,
      %c0_30 = arith.constant 0 : index
      %c0_31 = arith.constant 0 : index
      %c0_32 = arith.constant 0 : index
      %59 = vector.load %arg3[%c0_30, %c0_31, %c0_32] : memref<8x8x128xbf16, #tpu.memory_space<vmem>>, vector<8x8x128xbf16>
      %60 = arith.extf %59 : vector<8x8x128xbf16> to vector<8x8x128xf32>
      %61 = vector.shape_cast %57 : vector<8x128xf32> to vector<8x1x128xf32>
      %62 = vector.broadcast %61 : vector<8x1x128xf32> to vector<8x8x128xf32>
      %63 = arith.mulf %62, %60 : vector<8x8x128xf32>
      %cst_33 = arith.constant dense<0.000000e+00> : vector<8x8xf32>
      %64 = vector.multi_reduction <add>, %63, %cst_33 [2] : vector<8x8x128xf32> to vector<8x8xf32>
      %c0_34 = arith.constant 0 : index
      %c0_35 = arith.constant 0 : index
      %65 = vector.load %arg4[%c0_34, %c0_35] : memref<1x8xf32, #tpu.memory_space<vmem>>, vector<1x8xf32>
      %66 = vector.broadcast %65 : vector<1x8xf32> to vector<8x8xf32>
      %67 = arith.addf %64, %66 : vector<8x8xf32>
      %cst_36 = arith.constant dense<0xFF800000> : vector<8xf32>
      %68 = vector.multi_reduction <maximumf>, %67, %cst_36 [1] : vector<8x8xf32> to vector<8xf32>
      %69 = vector.shape_cast %68 : vector<8xf32> to vector<8x1xf32>
      %70 = vector.broadcast %69 : vector<8x1xf32> to vector<8x8xf32>
      %71 = arith.subf %67, %70 : vector<8x8xf32>
      %72 = math.exp %71 : vector<8x8xf32>
      %cst_37 = arith.constant dense<0.000000e+00> : vector<8xf32>
      %73 = vector.multi_reduction <add>, %72, %cst_37 [1] : vector<8x8xf32> to vector<8xf32>
      %74 = vector.shape_cast %73 : vector<8xf32> to vector<8x1xf32>
      %75 = vector.broadcast %74 : vector<8x1xf32> to vector<8x8xf32>
      %76 = arith.divf %72, %75 : vector<8x8xf32>
      %77 = vector.shape_cast %76 : vector<8x8xf32> to vector<8x8x1xf32>
      %78 = vector.broadcast %77 : vector<8x8x1xf32> to vector<8x8x128xf32>
      %79 = arith.mulf %78, %60 : vector<8x8x128xf32>
      %cst_38 = arith.constant dense<0.000000e+00> : vector<8x128xf32>
      %80 = vector.multi_reduction <add>, %79, %cst_38 [1] : vector<8x8x128xf32> to vector<8x128xf32>
      %81 = arith.truncf %57 : vector<8x128xf32> to vector<8x128xbf16>
      %c0_39 = arith.constant 0 : index
      %c0_40 = arith.constant 0 : index
      %82 = vector.load %arg9[%c0_39, %c0_40] : memref<128x128xbf16, #tpu.memory_space<vmem>>, vector<128x128xbf16>
      %cst_41 = arith.constant dense<0.000000e+00> : vector<8x128xf32>
      %83 = tpu.matmul %81, %82, %cst_41 {dimension_numbers = #tpu.dot_dimension_numbers<[1], [0], [0], [1], [0, 0, 1, 1], [], []>} : vector<8x128xbf16>, vector<128x128xbf16>, vector<8x128xf32> -> vector<8x128xf32>
      %84 = arith.truncf %80 : vector<8x128xf32> to vector<8x128xbf16>
      %c0_42 = arith.constant 0 : index
      %c0_43 = arith.constant 0 : index
      %85 = vector.load %arg10[%c0_42, %c0_43] : memref<128x128xbf16, #tpu.memory_space<vmem>>, vector<128x128xbf16>
      %cst_44 = arith.constant dense<0.000000e+00> : vector<8x128xf32>
      %86 = tpu.matmul %84, %85, %cst_44 {dimension_numbers = #tpu.dot_dimension_numbers<[1], [0], [0], [1], [0, 0, 1, 1], [], []>} : vector<8x128xbf16>, vector<128x128xbf16>, vector<8x128xf32> -> vector<8x128xf32>
      %87 = arith.addf %83, %86 : vector<8x128xf32>
      %c0_45 = arith.constant 0 : index
      %c0_46 = arith.constant 0 : index
      %88 = vector.load %arg11[%c0_45, %c0_46] : memref<1x128xf32, #tpu.memory_space<vmem>>, vector<1x128xf32>
      %89 = vector.broadcast %88 : vector<1x128xf32> to vector<8x128xf32>
      %90 = arith.addf %87, %89 : vector<8x128xf32>
      %91 = math.tanh %90 : vector<8x128xf32>
      %92 = arith.truncf %91 : vector<8x128xf32> to vector<8x128xbf16>
      %c0_47 = arith.constant 0 : index
      %c0_48 = arith.constant 0 : index
      %93 = vector.load %arg17[%c0_47, %c0_48] : memref<8x128xbf16, #tpu.memory_space<vmem>>, vector<8x128xbf16>
      tpu.vector_store %arg17[%c0_47, %c0_48], %92 {strides = array<i32>} : memref<8x128xbf16, #tpu.memory_space<vmem>>, vector<8x128xbf16>,
    } else {
    }
    %c0 = arith.constant 0 : index
    %c0_1 = arith.constant 0 : index
    %3 = vector.load %arg17[%c0, %c0_1] : memref<8x128xbf16, #tpu.memory_space<vmem>>, vector<8x128xbf16>
    %c0_2 = arith.constant 0 : index
    %c0_3 = arith.constant 0 : index
    %4 = vector.load %arg12[%c0_2, %c0_3] : memref<128x128xbf16, #tpu.memory_space<vmem>>, vector<128x128xbf16>
    %cst = arith.constant dense<0.000000e+00> : vector<8x128xf32>
    %5 = tpu.matmul %3, %4, %cst {dimension_numbers = #tpu.dot_dimension_numbers<[1], [0], [0], [1], [0, 0, 1, 1], [], []>} : vector<8x128xbf16>, vector<128x128xbf16>, vector<8x128xf32> -> vector<8x128xf32>
    %c0_4 = arith.constant 0 : index
    %c0_5 = arith.constant 0 : index
    %6 = vector.load %arg13[%c0_4, %c0_5] : memref<1x128xf32, #tpu.memory_space<vmem>>, vector<1x128xf32>
    %7 = vector.broadcast %6 : vector<1x128xf32> to vector<8x128xf32>
    %8 = arith.addf %5, %7 : vector<8x128xf32>
    %cst_6 = arith.constant dense<0xFF800000> : vector<8xf32>
    %9 = vector.multi_reduction <maximumf>, %8, %cst_6 [1] : vector<8x128xf32> to vector<8xf32>
    %10 = vector.shape_cast %9 : vector<8xf32> to vector<8x1xf32>
    %11 = vector.broadcast %10 : vector<8x1xf32> to vector<8x128xf32>
    %12 = arith.subf %8, %11 : vector<8x128xf32>
    %13 = math.exp %12 : vector<8x128xf32>
    %c0_7 = arith.constant 0 : index
    %c0_8 = arith.constant 0 : index
    %14 = vector.load %arg14[%c0_7, %c0_8] : memref<8x128xf32, #tpu.memory_space<vmem>>, vector<8x128xf32>
    tpu.vector_store %arg14[%c0_7, %c0_8], %13 {strides = array<i32>} : memref<8x128xf32, #tpu.memory_space<vmem>>, vector<8x128xf32>,
    %15 = vector.shape_cast %10 : vector<8x1xf32> to vector<8x1xf32>
    %16 = vector.broadcast %15 : vector<8x1xf32> to vector<8x128xf32>
    %c0_9 = arith.constant 0 : index
    %c0_10 = arith.constant 0 : index
    %17 = vector.load %arg15[%c0_9, %c0_10] : memref<8x128xf32, #tpu.memory_space<vmem>>, vector<8x128xf32>
    tpu.vector_store %arg15[%c0_9, %c0_10], %16 {strides = array<i32>} : memref<8x128xf32, #tpu.memory_space<vmem>>, vector<8x128xf32>,
    return
  }
  func.func @transform_0(%arg0: i32) -> (i32, i32) {
    %c0_i32 = arith.constant 0 : i32
    %c0_i32_0 = arith.constant 0 : i32
    %c0_i32_1 = arith.constant 0 : i32
    return %c0_i32, %c0_i32_0 : i32, i32
  }
  func.func @transform_1(%arg0: i32) -> (i32, i32) {
    %c0_i32 = arith.constant 0 : i32
    %c0_i32_0 = arith.constant 0 : i32
    %c0_i32_1 = arith.constant 0 : i32
    return %c0_i32, %c0_i32_0 : i32, i32
  }
  func.func @transform_2(%arg0: i32) -> (i32, i32, i32) {
    %c0_i32 = arith.constant 0 : i32
    %c0_i32_0 = arith.constant 0 : i32
    %c0_i32_1 = arith.constant 0 : i32
    %c0_i32_2 = arith.constant 0 : i32
    return %c0_i32, %c0_i32_0, %c0_i32_1 : i32, i32, i32
  }
  func.func @transform_3(%arg0: i32) -> (i32, i32) {
    %c0_i32 = arith.constant 0 : i32
    %c0_i32_0 = arith.constant 0 : i32
    %c0_i32_1 = arith.constant 0 : i32
    return %c0_i32, %c0_i32_0 : i32, i32
  }
  func.func @transform_4(%arg0: i32) -> (i32, i32) {
    %c0_i32 = arith.constant 0 : i32
    %c0_i32_0 = arith.constant 0 : i32
    %c0_i32_1 = arith.constant 0 : i32
    return %c0_i32, %c0_i32_0 : i32, i32
  }
  func.func @transform_5(%arg0: i32) -> (i32, i32) {
    %c0_i32 = arith.constant 0 : i32
    %c0_i32_0 = arith.constant 0 : i32
    %c0_i32_1 = arith.constant 0 : i32
    return %c0_i32, %c0_i32_0 : i32, i32
  }
  func.func @transform_6(%arg0: i32) -> (i32, i32) {
    %c0_i32 = arith.constant 0 : i32
    %c0_i32_0 = arith.constant 0 : i32
    %c0_i32_1 = arith.constant 0 : i32
    return %c0_i32, %c0_i32_0 : i32, i32
  }
  func.func @transform_7(%arg0: i32) -> (i32, i32) {
    %c0_i32 = arith.constant 0 : i32
    %c0_i32_0 = arith.constant 0 : i32
    %c0_i32_1 = arith.constant 0 : i32
    return %c0_i32, %c0_i32_0 : i32, i32
  }
  func.func @transform_8(%arg0: i32) -> (i32, i32) {
    %c0_i32 = arith.constant 0 : i32
    %c0_i32_0 = arith.constant 0 : i32
    %c0_i32_1 = arith.constant 0 : i32
    return %c0_i32, %c0_i32_0 : i32, i32
  }
  func.func @transform_9(%arg0: i32) -> (i32, i32) {
    %c0_i32 = arith.constant 0 : i32
    %c0_i32_0 = arith.constant 0 : i32
    %c0_i32_1 = arith.constant 0 : i32
    return %c0_i32, %c0_i32_0 : i32, i32
  }
  func.func @transform_10(%arg0: i32) -> (i32, i32) {
    %c0_i32 = arith.constant 0 : i32
    %c0_i32_0 = arith.constant 0 : i32
    %c0_i32_1 = arith.constant 0 : i32
    return %c0_i32, %c0_i32_0 : i32, i32
  }
  func.func @transform_11(%arg0: i32) -> (i32, i32) {
    %c0_i32 = arith.constant 0 : i32
    %c0_i32_0 = arith.constant 0 : i32
    return %c0_i32, %arg0 : i32, i32
  }
  func.func @transform_12(%arg0: i32) -> (i32, i32) {
    %c0_i32 = arith.constant 0 : i32
    %c0_i32_0 = arith.constant 0 : i32
    return %c0_i32, %arg0 : i32, i32
  }
  func.func @transform_13(%arg0: i32) -> (i32, i32) {
    %c0_i32 = arith.constant 0 : i32
    %c0_i32_0 = arith.constant 0 : i32
    return %c0_i32, %arg0 : i32, i32
  }
  func.func @transform_14(%arg0: i32) -> (i32, i32) {
    %c0_i32 = arith.constant 0 : i32
    %c0_i32_0 = arith.constant 0 : i32
    return %c0_i32, %arg0 : i32, i32
  }
  func.func @transform_15(%arg0: i32) -> (i32, i32) {
    %c0_i32 = arith.constant 0 : i32
    %c0_i32_0 = arith.constant 0 : i32
    %c0_i32_1 = arith.constant 0 : i32
    return %c0_i32, %c0_i32_0 : i32, i32
  }
}

</mosaic_0001>

<llo_original>
// kernel: luong_attn_decoder_forward.1
$region0: #{luong_attn_decoder_forward.1}
  #allocation0 [shape = 'u32[]', space=smem, size = 0x4, offset = 0x4, fixed_abs, tag = 'smem constant byte address 0x4 - core index']
  #allocation1 [shape = 'u32[72,128]{1,0:T(1,128)}', space=vmem, size = 0x9000, scoped, tag = 'internal scratch']
  #allocation2 [shape = 'bf16[8,128]{1,0:T(8,128)(2,1)}', space=vmem, size = 0x800, scoped, tag = 'scratch operand']
  %s0 = inlined_call_operand.vmem [shape: f32[8,128], index: 0, kind: input, shape index: {}]
  %s1 = inlined_call_operand.vmem [shape: f32[8,128], index: 1, kind: input, shape index: {}]
  %s2 = inlined_call_operand.vmem [shape: bf16[8,8,128], index: 2, kind: input, shape index: {}]
  %s3 = inlined_call_operand.vmem [shape: f32[1,8], index: 3, kind: input, shape index: {}]
  %s4 = inlined_call_operand.hbm [shape: bf16[128,384], index: 4, kind: input, shape index: {}]
  %s5 = inlined_call_operand.hbm [shape: bf16[128,384], index: 5, kind: input, shape index: {}]
  %s6 = inlined_call_operand.vmem [shape: f32[1,384], index: 6, kind: input, shape index: {}]
  %s7 = inlined_call_operand.vmem [shape: f32[1,384], index: 7, kind: input, shape index: {}]
  %s8 = inlined_call_operand.vmem [shape: bf16[128,128], index: 8, kind: input, shape index: {}]
  %s9 = inlined_call_operand.hbm [shape: bf16[128,128], index: 9, kind: input, shape index: {}]
  %s10 = inlined_call_operand.vmem [shape: f32[1,128], index: 10, kind: input, shape index: {}]
  %s11 = inlined_call_operand.hbm [shape: bf16[128,128], index: 11, kind: input, shape index: {}]
  %s12 = inlined_call_operand.vmem [shape: f32[1,128], index: 12, kind: input, shape index: {}]
  %s13 = inlined_call_operand.vmem [shape: f32[8,128], index: 13, kind: output, shape index: {0}]
  %s14 = inlined_call_operand.vmem [shape: f32[8,128], index: 14, kind: output, shape index: {1}]
  %s15 = inlined_call_operand.vmem [shape: f32[8,128], index: 15, kind: output, shape index: {2}]
  %16 = xla_tuple %s13, %s14, %s15
  %s17 = sld [smem:[#allocation0]]
  $region98: #{luong_attn_decoder_forward.1} parent=0
    _
  %s19 = ssub.s32 1, %s17
  %s20 = scalar_select 0, %s19, %s17
  $region1: #{luong_attn_decoder_forward.1} parent=0
    #allocation3 [shape = 'u8[98304]{0}', space=vmem, size = 0x18000, scoped, tag = 'input window, operand 4, single buffered']
    #allocation4 [shape = 's32[1]{0}', space=sflag, size = 0x4, scoped, tag = 'scoped memory for luong_attn_decoder_forward.1']
    #allocation5 [shape = 'u8[98304]{0}', space=vmem, size = 0x18000, scoped, tag = 'input window, operand 5, single buffered']
    #allocation6 [shape = 's32[1]{0}', space=sflag, size = 0x4, scoped, tag = 'scoped memory for luong_attn_decoder_forward.1']
    #allocation7 [shape = 'u8[32768]{0}', space=vmem, size = 0x8000, scoped, tag = 'input window, operand 9, single buffered']
    #allocation8 [shape = 'u8[32768]{0}', space=vmem, size = 0x8000, scoped, tag = 'input window, operand 11, single buffered']
    #allocation9 [shape = 's32[1]{0}', space=sflag, size = 0x4, scoped, tag = 'scoped memory for luong_attn_decoder_forward.1']
    %21 = vsyncpa [#allocation4], 0
    %22 = vsyncpa [#allocation6], 0
    %23 = vsyncpa [#allocation9], 0
    // Predicated region
    $region2: #{luong_attn_decoder_forward.1} parent=1 // pred_check
      _
    $region3: #{luong_attn_decoder_forward.1} parent=1 // pred_check_branch
      %25 = sbr.rel (0) target = $region5
    $region4: #{luong_attn_decoder_forward.1} parent=1 // pred_region
      _
    $region5: #{luong_attn_decoder_forward.1} parent=1 // pred_fallthru
      _
    // Predicated region
    $region6: #{luong_attn_decoder_forward.1} parent=1 // pred_check
      _
    $region7: #{luong_attn_decoder_forward.1} parent=1 // pred_check_branch
      %27 = sbr.rel (0) target = $region9
    $region8: #{luong_attn_decoder_forward.1} parent=1 // pred_region
      _
    $region9: #{luong_attn_decoder_forward.1} parent=1 // pred_fallthru
      _
    // Predicated region
    $region10: #{luong_attn_decoder_forward.1} parent=1 // pred_check
      _
    $region11: #{luong_attn_decoder_forward.1} parent=1 // pred_check_branch
      %29 = sbr.rel (0) target = $region13
    $region12: #{luong_attn_decoder_forward.1} parent=1 // pred_region
      _
    $region13: #{luong_attn_decoder_forward.1} parent=1 // pred_fallthru
      _
    // Predicated region
    $region14: #{luong_attn_decoder_forward.1} parent=1 // pred_check
      _
    $region15: #{luong_attn_decoder_forward.1} parent=1 // pred_check_branch
      %31 = sbr.rel (0) target = $region17
    $region16: #{luong_attn_decoder_forward.1} parent=1 // pred_region
      _
    $region17: #{luong_attn_decoder_forward.1} parent=1 // pred_fallthru
      _
    // Predicated region
    $region18: #{luong_attn_decoder_forward.1} parent=1 // pred_check
      _
    $region19: #{luong_attn_decoder_forward.1} parent=1 // pred_check_branch
      %33 = sbr.rel (0) target = $region21
    $region20: #{luong_attn_decoder_forward.1} parent=1 // pred_region
      %35 = vsyncadd [#allocation4], 0
      %s36 = sshll.u32 %s4, 4
      %s37 = int_to_ptr.hbm [resolvable:$true] %s36
      %s38 = sshll.u32 [#allocation3], 4
      %s39 = int_to_ptr.vmem [resolvable:$true] %s38
      %44 = dma.hbm_to_vmem [thread:$0]  %s37, 3072, %s39, [#allocation4], 192, 192, 12
    $region21: #{luong_attn_decoder_forward.1} parent=1 // pred_fallthru
      _
    // Predicated region
    $region22: #{luong_attn_decoder_forward.1} parent=1 // pred_check
      _
    $region23: #{luong_attn_decoder_forward.1} parent=1 // pred_check_branch
      %46 = sbr.rel (0) target = $region25
    $region24: #{luong_attn_decoder_forward.1} parent=1 // pred_region
      %48 = vsyncadd [#allocation6], 0
      %s49 = sshll.u32 %s5, 4
      %s50 = int_to_ptr.hbm [resolvable:$true] %s49
      %s51 = sshll.u32 [#allocation5], 4
      %s52 = int_to_ptr.vmem [resolvable:$true] %s51
      %57 = dma.hbm_to_vmem [thread:$0]  %s50, 3072, %s52, [#allocation6], 192, 192, 12
    $region25: #{luong_attn_decoder_forward.1} parent=1 // pred_fallthru
      _
    // Predicated region
    $region26: #{luong_attn_decoder_forward.1} parent=1 // pred_check
      _
    $region27: #{luong_attn_decoder_forward.1} parent=1 // pred_check_branch
      %59 = sbr.rel (0) target = $region29
    $region28: #{luong_attn_decoder_forward.1} parent=1 // pred_region
      _
    $region29: #{luong_attn_decoder_forward.1} parent=1 // pred_fallthru
      _
    // Predicated region
    $region30: #{luong_attn_decoder_forward.1} parent=1 // pred_check
      _
    $region31: #{luong_attn_decoder_forward.1} parent=1 // pred_check_branch
      %61 = sbr.rel (0) target = $region33
    $region32: #{luong_attn_decoder_forward.1} parent=1 // pred_region
      _
    $region33: #{luong_attn_decoder_forward.1} parent=1 // pred_fallthru
      _
    // Predicated region
    $region34: #{luong_attn_decoder_forward.1} parent=1 // pred_check
      _
    $region35: #{luong_attn_decoder_forward.1} parent=1 // pred_check_branch
      %63 = sbr.rel (0) target = $region37
    $region36: #{luong_attn_decoder_forward.1} parent=1 // pred_region
      _
    $region37: #{luong_attn_decoder_forward.1} parent=1 // pred_fallthru
      _
    // Predicated region
    $region38: #{luong_attn_decoder_forward.1} parent=1 // pred_check
      _
    $region39: #{luong_attn_decoder_forward.1} parent=1 // pred_check_branch
      %65 = sbr.rel (0) target = $region41
    $region40: #{luong_attn_decoder_forward.1} parent=1 // pred_region
      %67 = vsyncadd [#allocation6], 0
      %s68 = sshll.u32 %s9, 4
      %s69 = int_to_ptr.hbm [resolvable:$true] %s68
      %s70 = sshll.u32 [#allocation7], 4
      %s71 = int_to_ptr.vmem [resolvable:$true] %s70
      %76 = dma.hbm_to_vmem [thread:$0]  %s69, 1024, %s71, [#allocation6], 64, 64, 4
    $region41: #{luong_attn_decoder_forward.1} parent=1 // pred_fallthru
      _
    // Predicated region
    $region42: #{luong_attn_decoder_forward.1} parent=1 // pred_check
      _
    $region43: #{luong_attn_decoder_forward.1} parent=1 // pred_check_branch
      %78 = sbr.rel (0) target = $region45
    $region44: #{luong_attn_decoder_forward.1} parent=1 // pred_region
      _
    $region45: #{luong_attn_decoder_forward.1} parent=1 // pred_fallthru
      _
    // Predicated region
    $region46: #{luong_attn_decoder_forward.1} parent=1 // pred_check
      _
    $region47: #{luong_attn_decoder_forward.1} parent=1 // pred_check_branch
      %80 = sbr.rel (0) target = $region49
    $region48: #{luong_attn_decoder_forward.1} parent=1 // pred_region
      %82 = vsyncadd [#allocation9], 0
      %s83 = sshll.u32 %s11, 4
      %s84 = int_to_ptr.hbm [resolvable:$true] %s83
      %s85 = sshll.u32 [#allocation8], 4
      %s86 = int_to_ptr.vmem [resolvable:$true] %s85
      %91 = dma.hbm_to_vmem [thread:$0]  %s84, 1024, %s86, [#allocation9], 64, 64, 4
    $region49: #{luong_attn_decoder_forward.1} parent=1 // pred_fallthru
      _
    // Predicated region
    $region50: #{luong_attn_decoder_forward.1} parent=1 // pred_check
      _
    $region51: #{luong_attn_decoder_forward.1} parent=1 // pred_check_branch
      %93 = sbr.rel (0) target = $region53
    $region52: #{luong_attn_decoder_forward.1} parent=1 // pred_region
      _
    $region53: #{luong_attn_decoder_forward.1} parent=1 // pred_fallthru
      _
    // Predicated region
    $region54: #{luong_attn_decoder_forward.1} parent=1 // pred_check
      _
    $region55: #{luong_attn_decoder_forward.1} parent=1 // pred_check_branch
      %95 = sbr.rel (0) target = $region57
    $region56: #{luong_attn_decoder_forward.1} parent=1 // pred_region
      %97 = dma.done [#allocation4], 3072
    $region57: #{luong_attn_decoder_forward.1} parent=1 // pred_fallthru
      _
    // Predicated region
    $region58: #{luong_attn_decoder_forward.1} parent=1 // pred_check
      _
    $region59: #{luong_attn_decoder_forward.1} parent=1 // pred_check_branch
      %99 = sbr.rel (0) target = $region61
    $region60: #{luong_attn_decoder_forward.1} parent=1 // pred_region
      %101 = dma.done [#allocation6], 3072
    $region61: #{luong_attn_decoder_forward.1} parent=1 // pred_fallthru
      _
    // Predicated region
    $region62: #{luong_attn_decoder_forward.1} parent=1 // pred_check
      _
    $region63: #{luong_attn_decoder_forward.1} parent=1 // pred_check_branch
      %103 = sbr.rel (0) target = $region65
    $region64: #{luong_attn_decoder_forward.1} parent=1 // pred_region
      %105 = dma.done [#allocation6], 1024
    $region65: #{luong_attn_decoder_forward.1} parent=1 // pred_fallthru
      _
    // Predicated region
    $region66: #{luong_attn_decoder_forward.1} parent=1 // pred_check
      _
    $region67: #{luong_attn_decoder_forward.1} parent=1 // pred_check_branch
      %107 = sbr.rel (0) target = $region69
    $region68: #{luong_attn_decoder_forward.1} parent=1 // pred_region
      %109 = dma.done [#allocation9], 1024
    $region69: #{luong_attn_decoder_forward.1} parent=1 // pred_fallthru
      _
    %p110 = scmp.eq.s32.totalorder 0, 0
    // Predicated region
    $region70: #{luong_attn_decoder_forward.1} parent=1 // pred_check
      %p111 = pneg %p110
    $region71: #{luong_attn_decoder_forward.1} parent=1 // pred_check_branch
      %113 = sbr.rel (%p111) target = $region73
    $region72: #{luong_attn_decoder_forward.1} parent=1 // pred_region
      %v114 = vld [vmem:[%s0] sm:$0xff]
      %v115 = vld [vmem:[%s1] sm:$0xff]
      %v116 = vpack.c.bf16 %v114, %v114
      %v117 = vld [vmem:[#allocation3] sm:$0xff]
      %v118 = vld [vmem:[#allocation3 + $0x8] sm:$0xf]
      %v119 = vld [vmem:[#allocation3 + $0xc] sm:$0xff]
      %v120 = vld [vmem:[#allocation3 + $0x14] sm:$0xf]
      %v121 = vld [vmem:[#allocation3 + $0x18] sm:$0xff]
      %v122 = vld [vmem:[#allocation3 + $0x20] sm:$0xf]
      %v123 = vld [vmem:[#allocation3 + $0x24] sm:$0xff]
      %v124 = vld [vmem:[#allocation3 + $0x2c] sm:$0xf]
      %v125 = vld [vmem:[#allocation3 + $0x30] sm:$0xff]
      %v126 = vld [vmem:[#allocation3 + $0x38] sm:$0xf]
      %v127 = vld [vmem:[#allocation3 + $0x3c] sm:$0xff]
      %v128 = vld [vmem:[#allocation3 + $0x44] sm:$0xf]
      %v129 = vld [vmem:[#allocation3 + $0x48] sm:$0xff]
      %v130 = vld [vmem:[#allocation3 + $0x50] sm:$0xf]
      %v131 = vld [vmem:[#allocation3 + $0x54] sm:$0xff]
      %v132 = vld [vmem:[#allocation3 + $0x5c] sm:$0xf]
      %v133 = vld [vmem:[#allocation3 + $0x60] sm:$0xff]
      %v134 = vld [vmem:[#allocation3 + $0x68] sm:$0xf]
      %v135 = vld [vmem:[#allocation3 + $0x6c] sm:$0xff]
      %v136 = vld [vmem:[#allocation3 + $0x74] sm:$0xf]
      %v137 = vld [vmem:[#allocation3 + $0x78] sm:$0xff]
      %v138 = vld [vmem:[#allocation3 + $0x80] sm:$0xf]
      %v139 = vld [vmem:[#allocation3 + $0x84] sm:$0xff]
      %v140 = vld [vmem:[#allocation3 + $0x8c] sm:$0xf]
      %v141 = vld [vmem:[#allocation3 + $0x90] sm:$0xff]
      %v142 = vld [vmem:[#allocation3 + $0x98] sm:$0xf]
      %v143 = vld [vmem:[#allocation3 + $0x9c] sm:$0xff]
      %v144 = vld [vmem:[#allocation3 + $0xa4] sm:$0xf]
      %v145 = vld [vmem:[#allocation3 + $0xa8] sm:$0xff]
      %v146 = vld [vmem:[#allocation3 + $0xb0] sm:$0xf]
      %v147 = vld [vmem:[#allocation3 + $0xb4] sm:$0xff]
      %v148 = vld [vmem:[#allocation3 + $0xbc] sm:$0xf]
      %v149 = vld [vmem:[%s6] sm:$0x7]
      %v151 = vperm.slane %v149, 0
      %v152 = vperm.slane %v149, 1
      %v153 = vperm.slane %v149, 2
      %v189 = vunpack.c.l.b16 %v117
      %v190 = vunpack.c.h.b16 %v117
      %v191 = vunpack.c.l.b16 %v118
      %v192 = vunpack.c.l.b16 %v119
      %v193 = vunpack.c.h.b16 %v119
      %v194 = vunpack.c.l.b16 %v120
      %v195 = vunpack.c.l.b16 %v121
      %v196 = vunpack.c.h.b16 %v121
      %v197 = vunpack.c.l.b16 %v122
      %v198 = vunpack.c.l.b16 %v123
      %v199 = vunpack.c.h.b16 %v123
      %v200 = vunpack.c.l.b16 %v124
      %v201 = vunpack.c.l.b16 %v125
      %v202 = vunpack.c.h.b16 %v125
      %v203 = vunpack.c.l.b16 %v126
      %v204 = vunpack.c.l.b16 %v127
      %v205 = vunpack.c.h.b16 %v127
      %v206 = vunpack.c.l.b16 %v128
      %v207 = vunpack.c.l.b16 %v129
      %v208 = vunpack.c.h.b16 %v129
      %v209 = vunpack.c.l.b16 %v130
      %v210 = vunpack.c.l.b16 %v131
      %v211 = vunpack.c.h.b16 %v131
      %v212 = vunpack.c.l.b16 %v132
      %v213 = vunpack.c.l.b16 %v133
      %v214 = vunpack.c.h.b16 %v133
      %v215 = vunpack.c.l.b16 %v134
      %v216 = vunpack.c.l.b16 %v135
      %v217 = vunpack.c.h.b16 %v135
      %v218 = vunpack.c.l.b16 %v136
      %v219 = vunpack.c.l.b16 %v137
      %v220 = vunpack.c.h.b16 %v137
      %v221 = vunpack.c.l.b16 %v138
      %v222 = vunpack.c.l.b16 %v139
      %v223 = vunpack.c.h.b16 %v139
      %v224 = vunpack.c.l.b16 %v140
      %v225 = vunpack.c.l.b16 %v141
      %v226 = vunpack.c.h.b16 %v141
      %v227 = vunpack.c.l.b16 %v142
      %v228 = vunpack.c.l.b16 %v143
      %v229 = vunpack.c.h.b16 %v143
      %v230 = vunpack.c.l.b16 %v144
      %v231 = vunpack.c.l.b16 %v145
      %v232 = vunpack.c.h.b16 %v145
      %v233 = vunpack.c.l.b16 %v146
      %v234 = vunpack.c.l.b16 %v147
      %v235 = vunpack.c.h.b16 %v147
      %v236 = vunpack.c.l.b16 %v148
      %v237 = vpack.c.b16 %v192, %v189
      %v238 = vpack.c.b16 %v193, %v190
      %v239 = vpack.c.b16 %v194, %v191
      %v240 = vpack.c.b16 %v198, %v195
      %v241 = vpack.c.b16 %v199, %v196
      %v242 = vpack.c.b16 %v200, %v197
      %v243 = vpack.c.b16 %v204, %v201
      %v244 = vpack.c.b16 %v205, %v202
      %v245 = vpack.c.b16 %v206, %v203
      %v246 = vpack.c.b16 %v210, %v207
      %v247 = vpack.c.b16 %v211, %v208
      %v248 = vpack.c.b16 %v212, %v209
      %v249 = vpack.c.b16 %v216, %v213
      %v250 = vpack.c.b16 %v217, %v214
      %v251 = vpack.c.b16 %v218, %v215
      %v252 = vpack.c.b16 %v222, %v219
      %v253 = vpack.c.b16 %v223, %v220
      %v254 = vpack.c.b16 %v224, %v221
      %v255 = vpack.c.b16 %v228, %v225
      %v256 = vpack.c.b16 %v229, %v226
      %v257 = vpack.c.b16 %v230, %v227
      %v258 = vpack.c.b16 %v234, %v231
      %v259 = vpack.c.b16 %v235, %v232
      %v260 = vpack.c.b16 %v236, %v233
      %285 = vmatpush.bf16.msra.mxu0 %v258
      %286 = vmatpush.bf16.msra.mxu0 %v255
      %287 = vmatpush.bf16.msra.mxu0 %v252
      %288 = vmatpush.bf16.msra.mxu0 %v249
      %289 = vmatpush.bf16.msra.mxu0 %v246
      %290 = vmatpush.bf16.msra.mxu0 %v243
      %291 = vmatpush.bf16.msra.mxu0 %v240
      %292 = vmatpush.bf16.msra.mxu0 %v237
      %293 = vmatmul.bf16.gmra.mxu0 %v116
      %v294 = vpop.f32.mrf.mxu0
      %v295 = vadd.f32 %v151, %v294
      %v296 = vpop.f32.mrf.mxu0
      %297 = vdwg.mxu0
      %298 = vmatpush.bf16.msra.mxu0 %v259
      %299 = vmatpush.bf16.msra.mxu0 %v256
      %300 = vmatpush.bf16.msra.mxu0 %v253
      %301 = vmatpush.bf16.msra.mxu0 %v250
      %302 = vmatpush.bf16.msra.mxu0 %v247
      %303 = vmatpush.bf16.msra.mxu0 %v244
      %304 = vmatpush.bf16.msra.mxu0 %v241
      %305 = vmatpush.bf16.msra.mxu0 %v238
      %306 = vmatmul.bf16.gmra.mxu0 %v116
      %v307 = vpop.f32.mrf.mxu0
      %v308 = vadd.f32 %v152, %v307
      %v309 = vpop.f32.mrf.mxu0
      %310 = vdwg.mxu0
      %311 = vmatpush.bf16.msra.mxu0 %v260
      %312 = vmatpush.bf16.msra.mxu0 %v257
      %313 = vmatpush.bf16.msra.mxu0 %v254
      %314 = vmatpush.bf16.msra.mxu0 %v251
      %315 = vmatpush.bf16.msra.mxu0 %v248
      %316 = vmatpush.bf16.msra.mxu0 %v245
      %317 = vmatpush.bf16.msra.mxu0 %v242
      %318 = vmatpush.bf16.msra.mxu0 %v239
      %319 = vmatmul.bf16.gmra.mxu0 %v116
      %v320 = vpop.f32.mrf.mxu0
      %v321 = vadd.f32 %v153, %v320
      %v322 = vpop.f32.mrf.mxu0
      %323 = vdwg.mxu0
      %v324 = vpack.c.bf16 %v115, %v115
      %v325 = vld [vmem:[#allocation5] sm:$0xff]
      %v326 = vld [vmem:[#allocation5 + $0x8] sm:$0xf]
      %v327 = vld [vmem:[#allocation5 + $0xc] sm:$0xff]
      %v328 = vld [vmem:[#allocation5 + $0x14] sm:$0xf]
      %v329 = vld [vmem:[#allocation5 + $0x18] sm:$0xff]
      %v330 = vld [vmem:[#allocation5 + $0x20] sm:$0xf]
      %v331 = vld [vmem:[#allocation5 + $0x24] sm:$0xff]
      %v332 = vld [vmem:[#allocation5 + $0x2c] sm:$0xf]
      %v333 = vld [vmem:[#allocation5 + $0x30] sm:$0xff]
      %v334 = vld [vmem:[#allocation5 + $0x38] sm:$0xf]
      %v335 = vld [vmem:[#allocation5 + $0x3c] sm:$0xff]
      %v336 = vld [vmem:[#allocation5 + $0x44] sm:$0xf]
      %v337 = vld [vmem:[#allocation5 + $0x48] sm:$0xff]
      %v338 = vld [vmem:[#allocation5 + $0x50] sm:$0xf]
      %v339 = vld [vmem:[#allocation5 + $0x54] sm:$0xff]
      %v340 = vld [vmem:[#allocation5 + $0x5c] sm:$0xf]
      %v341 = vld [vmem:[#allocation5 + $0x60] sm:$0xff]
      %v342 = vld [vmem:[#allocation5 + $0x68] sm:$0xf]
      %v343 = vld [vmem:[#allocation5 + $0x6c] sm:$0xff]
      %v344 = vld [vmem:[#allocation5 + $0x74] sm:$0xf]
      %v345 = vld [vmem:[#allocation5 + $0x78] sm:$0xff]
      %v346 = vld [vmem:[#allocation5 + $0x80] sm:$0xf]
      %v347 = vld [vmem:[#allocation5 + $0x84] sm:$0xff]
      %v348 = vld [vmem:[#allocation5 + $0x8c] sm:$0xf]
      %v349 = vld [vmem:[#allocation5 + $0x90] sm:$0xff]
      %v350 = vld [vmem:[#allocation5 + $0x98] sm:$0xf]
      %v351 = vld [vmem:[#allocation5 + $0x9c] sm:$0xff]
      %v352 = vld [vmem:[#allocation5 + $0xa4] sm:$0xf]
      %v353 = vld [vmem:[#allocation5 + $0xa8] sm:$0xff]
      %v354 = vld [vmem:[#allocation5 + $0xb0] sm:$0xf]
      %v355 = vld [vmem:[#allocation5 + $0xb4] sm:$0xff]
      %v356 = vld [vmem:[#allocation5 + $0xbc] sm:$0xf]
      %v357 = vld [vmem:[%s7] sm:$0x7]
      %v359 = vperm.slane %v357, 0
      %v360 = vperm.slane %v357, 1
      %v361 = vperm.slane %v357, 2
      %v397 = vunpack.c.l.b16 %v325
      %v398 = vunpack.c.h.b16 %v325
      %v399 = vunpack.c.l.b16 %v326
      %v400 = vunpack.c.l.b16 %v327
      %v401 = vunpack.c.h.b16 %v327
      %v402 = vunpack.c.l.b16 %v328
      %v403 = vunpack.c.l.b16 %v329
      %v404 = vunpack.c.h.b16 %v329
      %v405 = vunpack.c.l.b16 %v330
      %v406 = vunpack.c.l.b16 %v331
      %v407 = vunpack.c.h.b16 %v331
      %v408 = vunpack.c.l.b16 %v332
      %v409 = vunpack.c.l.b16 %v333
      %v410 = vunpack.c.h.b16 %v333
      %v411 = vunpack.c.l.b16 %v334
      %v412 = vunpack.c.l.b16 %v335
      %v413 = vunpack.c.h.b16 %v335
      %v414 = vunpack.c.l.b16 %v336
      %v415 = vunpack.c.l.b16 %v337
      %v416 = vunpack.c.h.b16 %v337
      %v417 = vunpack.c.l.b16 %v338
      %v418 = vunpack.c.l.b16 %v339
      %v419 = vunpack.c.h.b16 %v339
      %v420 = vunpack.c.l.b16 %v340
      %v421 = vunpack.c.l.b16 %v341
      %v422 = vunpack.c.h.b16 %v341
      %v423 = vunpack.c.l.b16 %v342
      %v424 = vunpack.c.l.b16 %v343
      %v425 = vunpack.c.h.b16 %v343
      %v426 = vunpack.c.l.b16 %v344
      %v427 = vunpack.c.l.b16 %v345
      %v428 = vunpack.c.h.b16 %v345
      %v429 = vunpack.c.l.b16 %v346
      %v430 = vunpack.c.l.b16 %v347
      %v431 = vunpack.c.h.b16 %v347
      %v432 = vunpack.c.l.b16 %v348
      %v433 = vunpack.c.l.b16 %v349
      %v434 = vunpack.c.h.b16 %v349
      %v435 = vunpack.c.l.b16 %v350
      %v436 = vunpack.c.l.b16 %v351
      %v437 = vunpack.c.h.b16 %v351
      %v438 = vunpack.c.l.b16 %v352
      %v439 = vunpack.c.l.b16 %v353
      %v440 = vunpack.c.h.b16 %v353
      %v441 = vunpack.c.l.b16 %v354
      %v442 = vunpack.c.l.b16 %v355
      %v443 = vunpack.c.h.b16 %v355
      %v444 = vunpack.c.l.b16 %v356
      %v445 = vpack.c.b16 %v400, %v397
      %v446 = vpack.c.b16 %v401, %v398
      %v447 = vpack.c.b16 %v402, %v399
      %v448 = vpack.c.b16 %v406, %v403
      %v449 = vpack.c.b16 %v407, %v404
      %v450 = vpack.c.b16 %v408, %v405
      %v451 = vpack.c.b16 %v412, %v409
      %v452 = vpack.c.b16 %v413, %v410
      %v453 = vpack.c.b16 %v414, %v411
      %v454 = vpack.c.b16 %v418, %v415
      %v455 = vpack.c.b16 %v419, %v416
      %v456 = vpack.c.b16 %v420, %v417
      %v457 = vpack.c.b16 %v424, %v421
      %v458 = vpack.c.b16 %v425, %v422
      %v459 = vpack.c.b16 %v426, %v423
      %v460 = vpack.c.b16 %v430, %v427
      %v461 = vpack.c.b16 %v431, %v428
      %v462 = vpack.c.b16 %v432, %v429
      %v463 = vpack.c.b16 %v436, %v433
      %v464 = vpack.c.b16 %v437, %v434
      %v465 = vpack.c.b16 %v438, %v435
      %v466 = vpack.c.b16 %v442, %v439
      %v467 = vpack.c.b16 %v443, %v440
      %v468 = vpack.c.b16 %v444, %v441
      %493 = vmatpush.bf16.msra.mxu0 %v466
      %494 = vmatpush.bf16.msra.mxu0 %v463
      %495 = vmatpush.bf16.msra.mxu0 %v460
      %496 = vmatpush.bf16.msra.mxu0 %v457
      %497 = vmatpush.bf16.msra.mxu0 %v454
      %498 = vmatpush.bf16.msra.mxu0 %v451
      %499 = vmatpush.bf16.msra.mxu0 %v448
      %500 = vmatpush.bf16.msra.mxu0 %v445
      %501 = vmatmul.bf16.gmra.mxu0 %v324
      %v502 = vpop.f32.mrf.mxu0
      %v503 = vadd.f32 %v359, %v502
      %v504 = vpop.f32.mrf.mxu0
      %505 = vdwg.mxu0
      %506 = vmatpush.bf16.msra.mxu0 %v467
      %507 = vmatpush.bf16.msra.mxu0 %v464
      %508 = vmatpush.bf16.msra.mxu0 %v461
      %509 = vmatpush.bf16.msra.mxu0 %v458
      %510 = vmatpush.bf16.msra.mxu0 %v455
      %511 = vmatpush.bf16.msra.mxu0 %v452
      %512 = vmatpush.bf16.msra.mxu0 %v449
      %513 = vmatpush.bf16.msra.mxu0 %v446
      %514 = vmatmul.bf16.gmra.mxu0 %v324
      %v515 = vpop.f32.mrf.mxu0
      %v516 = vadd.f32 %v360, %v515
      %v517 = vpop.f32.mrf.mxu0
      %518 = vdwg.mxu0
      %519 = vmatpush.bf16.msra.mxu0 %v468
      %520 = vmatpush.bf16.msra.mxu0 %v465
      %521 = vmatpush.bf16.msra.mxu0 %v462
      %522 = vmatpush.bf16.msra.mxu0 %v459
      %523 = vmatpush.bf16.msra.mxu0 %v456
      %524 = vmatpush.bf16.msra.mxu0 %v453
      %525 = vmatpush.bf16.msra.mxu0 %v450
      %526 = vmatpush.bf16.msra.mxu0 %v447
      %527 = vmatmul.bf16.gmra.mxu0 %v324
      %v528 = vpop.f32.mrf.mxu0
      %v529 = vadd.f32 %v361, %v528
      %v530 = vpop.f32.mrf.mxu0
      %531 = vdwg.mxu0
      %v532 = vadd.f32 %v295, %v503
      %v533 = vxor.u32 %v532, 2147483648
      %v534 = vmul.f32 %v533, 1.442695
      %v535 = vpow.pop %v534
      %v536 = vadd.f32 %v535, 1.0
      %v537 = vrcp.pop %v536
      %v538 = vmul.f32 %v536, %v537
      %v539 = vsub.f32 1.0, %v538
      %v540 = vmul.f32 %v537, %v539
      %v541 = vadd.f32 %v537, %v540
      %vm542 = vweird.f32 %v536
      %vm543 = vweird.f32 %v537
      %vm544 = vmor %vm542, %vm543
      %v545 = vsel %vm544, %v537, %v541
      %v546 = vand.u32 2147483647, %v536
      %vm547 = vcmp.eq.f32.partialorder %v546, 8.507059e+37
      %v548 = vand.u32 %v536, 2147483648
      %v549 = vor.u32 1.1754944e-38, %v548
      %v550 = vsel %vm547, %v549, %v545
      %v551 = vmul.f32 1.0, %v550
      %v552 = vadd.f32 %v308, %v516
      %v553 = vxor.u32 %v552, 2147483648
      %v554 = vmul.f32 %v553, 1.442695
      %v555 = vpow.pop %v554
      %v556 = vadd.f32 %v555, 1.0
      %v557 = vrcp.pop %v556
      %v558 = vmul.f32 %v556, %v557
      %v559 = vsub.f32 1.0, %v558
      %v560 = vmul.f32 %v557, %v559
      %v561 = vadd.f32 %v557, %v560
      %vm562 = vweird.f32 %v556
      %vm563 = vweird.f32 %v557
      %vm564 = vmor %vm562, %vm563
      %v565 = vsel %vm564, %v557, %v561
      %v566 = vand.u32 2147483647, %v556
      %vm567 = vcmp.eq.f32.partialorder %v566, 8.507059e+37
      %v568 = vand.u32 %v556, 2147483648
      %v569 = vor.u32 1.1754944e-38, %v568
      %v570 = vsel %vm567, %v569, %v565
      %v571 = vmul.f32 1.0, %v570
      %v572 = vmul.f32 %v551, %v529
      %v573 = vadd.f32 %v321, %v572
      %v574 = vtanh.pop %v573
      %v575 = vsub.f32 1.0, %v571
      %v576 = vmul.f32 %v575, %v574
      %v577 = vmul.f32 %v571, %v115
      %v578 = vadd.f32 %v576, %v577
      %579 = vst [vmem:[%s15] sm:$0xff] %v578
      %v580 = vld [vmem:[%s2] sm:$0xf]
      %v581 = vld [vmem:[%s2 + $0x4] sm:$0xf]
      %v582 = vld [vmem:[%s2 + $0x8] sm:$0xf]
      %v583 = vld [vmem:[%s2 + $0xc] sm:$0xf]
      %v584 = vld [vmem:[%s2 + $0x10] sm:$0xf]
      %v585 = vld [vmem:[%s2 + $0x14] sm:$0xf]
      %v586 = vld [vmem:[%s2 + $0x18] sm:$0xf]
      %v587 = vld [vmem:[%s2 + $0x1c] sm:$0xf]
      %v588 = vunpack.c.l.bf16 %v580
      %v589 = vunpack.c.l.bf16 %v581
      %v590 = vunpack.c.l.bf16 %v582
      %v591 = vunpack.c.l.bf16 %v583
      %v592 = vunpack.c.l.bf16 %v584
      %v593 = vunpack.c.l.bf16 %v585
      %v594 = vunpack.c.l.bf16 %v586
      %v595 = vunpack.c.l.bf16 %v587
      %v597 = vrot.slane %v578, 1
      %v598 = vrot.slane %v578, 2
      %v599 = vrot.slane %v578, 3
      %v600 = vrot.slane %v578, 4
      %v601 = vrot.slane %v578, 5
      %v602 = vrot.slane %v578, 6
      %v603 = vrot.slane %v578, 7
      %v604 = vperm.slane %v578, 0
      %v605 = vperm.slane %v597, 0
      %v606 = vperm.slane %v598, 0
      %v607 = vperm.slane %v599, 0
      %v608 = vperm.slane %v600, 0
      %v609 = vperm.slane %v601, 0
      %v610 = vperm.slane %v602, 0
      %v611 = vperm.slane %v603, 0
      %v620 = vmul.f32 %v604, %v588
      %v621 = vmul.f32 %v605, %v589
      %v622 = vmul.f32 %v606, %v590
      %v623 = vmul.f32 %v607, %v591
      %v624 = vmul.f32 %v608, %v592
      %v625 = vmul.f32 %v609, %v593
      %v626 = vmul.f32 %v610, %v594
      %v627 = vmul.f32 %v611, %v595
      %628 = vadd.xlane.f32.xlu0 %v620
      %v629 = vpop.xlane.xlu0 %628
      %630 = vadd.xlane.f32.xlu0 %v621
      %v631 = vpop.xlane.xlu0 %630
      %632 = vadd.xlane.f32.xlu0 %v622
      %v633 = vpop.xlane.xlu0 %632
      %634 = vadd.xlane.f32.xlu0 %v623
      %v635 = vpop.xlane.xlu0 %634
      %636 = vadd.xlane.f32.xlu0 %v624
      %v637 = vpop.xlane.xlu0 %636
      %638 = vadd.xlane.f32.xlu0 %v625
      %v639 = vpop.xlane.xlu0 %638
      %640 = vadd.xlane.f32.xlu0 %v626
      %v641 = vpop.xlane.xlu0 %640
      %642 = vadd.xlane.f32.xlu0 %v627
      %v643 = vpop.xlane.xlu0 %642
      %v644 = vld [vmem:[%s3] sm:$0x1]
      %v646 = vperm.slane %v644, 0
      %v647 = vlaneseq
      %v648 = vshrl.u32 %v647, 7
      %650 = vset.pattern.permute.xlu0 %v648
      %651 = vperm.xlu0 %650, %v646
      %v652 = vpop.permute.xlu0 %651
      %v654 = vadd.f32 %v629, %v652
      %v655 = vadd.f32 %v631, %v652
      %v656 = vadd.f32 %v633, %v652
      %v657 = vadd.f32 %v635, %v652
      %v658 = vadd.f32 %v637, %v652
      %v659 = vadd.f32 %v639, %v652
      %v660 = vadd.f32 %v641, %v652
      %v661 = vadd.f32 %v643, %v652
      %670 = vset.pattern.permute.xlu0 0
      %671 = vperm.xlu0 %670, %v654
      %v672 = vpop.permute.xlu0 %671
      %673 = vset.pattern.permute.xlu0 0
      %674 = vperm.xlu0 %673, %v655
      %v675 = vpop.permute.xlu0 %674
      %676 = vset.pattern.permute.xlu0 0
      %677 = vperm.xlu0 %676, %v656
      %v678 = vpop.permute.xlu0 %677
      %679 = vset.pattern.permute.xlu0 0
      %680 = vperm.xlu0 %679, %v657
      %v681 = vpop.permute.xlu0 %680
      %682 = vset.pattern.permute.xlu0 0
      %683 = vperm.xlu0 %682, %v658
      %v684 = vpop.permute.xlu0 %683
      %685 = vset.pattern.permute.xlu0 0
      %686 = vperm.xlu0 %685, %v659
      %v687 = vpop.permute.xlu0 %686
      %688 = vset.pattern.permute.xlu0 0
      %689 = vperm.xlu0 %688, %v660
      %v690 = vpop.permute.xlu0 %689
      %691 = vset.pattern.permute.xlu0 0
      %692 = vperm.xlu0 %691, %v661
      %v693 = vpop.permute.xlu0 %692
      %v694 = vlaneseq
      %v695 = vand.u32 %v694, 127
      %v696 = vperm.slane %v672, %v695
      %v697 = vperm.slane %v675, %v695
      %v698 = vperm.slane %v678, %v695
      %v699 = vperm.slane %v681, %v695
      %v700 = vperm.slane %v684, %v695
      %v701 = vperm.slane %v687, %v695
      %v702 = vperm.slane %v690, %v695
      %v703 = vperm.slane %v693, %v695
      %vm704 = vcmask 1041409
      %v705 = vsel %vm704, %v697, %v696
      %vm706 = vcmask 1042434
      %v707 = vsel %vm706, %v698, %v705
      %vm708 = vcmask 1043459
      %v709 = vsel %vm708, %v699, %v707
      %vm710 = vcmask 1044484
      %v711 = vsel %vm710, %v700, %v709
      %vm712 = vcmask 1045509
      %v713 = vsel %vm712, %v701, %v711
      %vm714 = vcmask 1046534
      %v715 = vsel %vm714, %v702, %v713
      %vm716 = vcmask 1047559
      %v717 = vsel %vm716, %v703, %v715
      %vm719 = vcmask 64512
      %v720 = vsel %vm719, %v717, -inf
      %721 = vmax.xlane.f32.xlu0 %v720
      %v722 = vpop.xlane.xlu0 %721
      %v724 = vperm.slane %v722, 0
      %v725 = vperm.slane %v722, 1
      %v726 = vperm.slane %v722, 2
      %v727 = vperm.slane %v722, 3
      %v728 = vperm.slane %v722, 4
      %v729 = vperm.slane %v722, 5
      %v730 = vperm.slane %v722, 6
      %v731 = vperm.slane %v722, 7
      %v740 = vsub.f32 %v654, %v724
      %v741 = vsub.f32 %v655, %v725
      %v742 = vsub.f32 %v656, %v726
      %v743 = vsub.f32 %v657, %v727
      %v744 = vsub.f32 %v658, %v728
      %v745 = vsub.f32 %v659, %v729
      %v746 = vsub.f32 %v660, %v730
      %v747 = vsub.f32 %v661, %v731
      %v748 = vmul.f32 %v740, 1.442695
      %v749 = vpow.pop %v748
      %v750 = vmul.f32 %v741, 1.442695
      %v751 = vpow.pop %v750
      %v752 = vmul.f32 %v742, 1.442695
      %v753 = vpow.pop %v752
      %v754 = vmul.f32 %v743, 1.442695
      %v755 = vpow.pop %v754
      %v756 = vmul.f32 %v744, 1.442695
      %v757 = vpow.pop %v756
      %v758 = vmul.f32 %v745, 1.442695
      %v759 = vpow.pop %v758
      %v760 = vmul.f32 %v746, 1.442695
      %v761 = vpow.pop %v760
      %v762 = vmul.f32 %v747, 1.442695
      %v763 = vpow.pop %v762
      %772 = vset.pattern.permute.xlu0 0
      %773 = vperm.xlu0 %772, %v749
      %v774 = vpop.permute.xlu0 %773
      %775 = vset.pattern.permute.xlu0 0
      %776 = vperm.xlu0 %775, %v751
      %v777 = vpop.permute.xlu0 %776
      %778 = vset.pattern.permute.xlu0 0
      %779 = vperm.xlu0 %778, %v753
      %v780 = vpop.permute.xlu0 %779
      %781 = vset.pattern.permute.xlu0 0
      %782 = vperm.xlu0 %781, %v755
      %v783 = vpop.permute.xlu0 %782
      %784 = vset.pattern.permute.xlu0 0
      %785 = vperm.xlu0 %784, %v757
      %v786 = vpop.permute.xlu0 %785
      %787 = vset.pattern.permute.xlu0 0
      %788 = vperm.xlu0 %787, %v759
      %v789 = vpop.permute.xlu0 %788
      %790 = vset.pattern.permute.xlu0 0
      %791 = vperm.xlu0 %790, %v761
      %v792 = vpop.permute.xlu0 %791
      %793 = vset.pattern.permute.xlu0 0
      %794 = vperm.xlu0 %793, %v763
      %v795 = vpop.permute.xlu0 %794
      %v796 = vperm.slane %v774, %v695
      %v797 = vperm.slane %v777, %v695
      %v798 = vperm.slane %v780, %v695
      %v799 = vperm.slane %v783, %v695
      %v800 = vperm.slane %v786, %v695
      %v801 = vperm.slane %v789, %v695
      %v802 = vperm.slane %v792, %v695
      %v803 = vperm.slane %v795, %v695
      %v804 = vsel %vm704, %v797, %v796
      %v805 = vsel %vm706, %v798, %v804
      %v806 = vsel %vm708, %v799, %v805
      %v807 = vsel %vm710, %v800, %v806
      %v808 = vsel %vm712, %v801, %v807
      %v809 = vsel %vm714, %v802, %v808
      %v810 = vsel %vm716, %v803, %v809
      %v812 = vsel %vm719, %v810, 0.0
      %813 = vadd.xlane.f32.xlu0 %v812
      %v814 = vpop.xlane.xlu0 %813
      %v816 = vperm.slane %v814, 0
      %v817 = vperm.slane %v814, 1
      %v818 = vperm.slane %v814, 2
      %v819 = vperm.slane %v814, 3
      %v820 = vperm.slane %v814, 4
      %v821 = vperm.slane %v814, 5
      %v822 = vperm.slane %v814, 6
      %v823 = vperm.slane %v814, 7
      %v832 = vrcp.pop %v816
      %v833 = vmul.f32 %v816, %v832
      %v834 = vsub.f32 1.0, %v833
      %v835 = vmul.f32 %v832, %v834
      %v836 = vadd.f32 %v832, %v835
      %vm837 = vweird.f32 %v816
      %vm838 = vweird.f32 %v832
      %vm839 = vmor %vm837, %vm838
      %v840 = vsel %vm839, %v832, %v836
      %v841 = vand.u32 2147483647, %v816
      %vm842 = vcmp.eq.f32.partialorder %v841, 8.507059e+37
      %v843 = vand.u32 %v816, 2147483648
      %v844 = vor.u32 1.1754944e-38, %v843
      %v845 = vsel %vm842, %v844, %v840
      %v846 = vmul.f32 %v749, %v845
      %v847 = vrcp.pop %v817
      %v848 = vmul.f32 %v817, %v847
      %v849 = vsub.f32 1.0, %v848
      %v850 = vmul.f32 %v847, %v849
      %v851 = vadd.f32 %v847, %v850
      %vm852 = vweird.f32 %v817
      %vm853 = vweird.f32 %v847
      %vm854 = vmor %vm852, %vm853
      %v855 = vsel %vm854, %v847, %v851
      %v856 = vand.u32 2147483647, %v817
      %vm857 = vcmp.eq.f32.partialorder %v856, 8.507059e+37
      %v858 = vand.u32 %v817, 2147483648
      %v859 = vor.u32 1.1754944e-38, %v858
      %v860 = vsel %vm857, %v859, %v855
      %v861 = vmul.f32 %v751, %v860
      %v862 = vrcp.pop %v818
      %v863 = vmul.f32 %v818, %v862
      %v864 = vsub.f32 1.0, %v863
      %v865 = vmul.f32 %v862, %v864
      %v866 = vadd.f32 %v862, %v865
      %vm867 = vweird.f32 %v818
      %vm868 = vweird.f32 %v862
      %vm869 = vmor %vm867, %vm868
      %v870 = vsel %vm869, %v862, %v866
      %v871 = vand.u32 2147483647, %v818
      %vm872 = vcmp.eq.f32.partialorder %v871, 8.507059e+37
      %v873 = vand.u32 %v818, 2147483648
      %v874 = vor.u32 1.1754944e-38, %v873
      %v875 = vsel %vm872, %v874, %v870
      %v876 = vmul.f32 %v753, %v875
      %v877 = vrcp.pop %v819
      %v878 = vmul.f32 %v819, %v877
      %v879 = vsub.f32 1.0, %v878
      %v880 = vmul.f32 %v877, %v879
      %v881 = vadd.f32 %v877, %v880
      %vm882 = vweird.f32 %v819
      %vm883 = vweird.f32 %v877
      %vm884 = vmor %vm882, %vm883
      %v885 = vsel %vm884, %v877, %v881
      %v886 = vand.u32 2147483647, %v819
      %vm887 = vcmp.eq.f32.partialorder %v886, 8.507059e+37
      %v888 = vand.u32 %v819, 2147483648
      %v889 = vor.u32 1.1754944e-38, %v888
      %v890 = vsel %vm887, %v889, %v885
      %v891 = vmul.f32 %v755, %v890
      %v892 = vrcp.pop %v820
      %v893 = vmul.f32 %v820, %v892
      %v894 = vsub.f32 1.0, %v893
      %v895 = vmul.f32 %v892, %v894
      %v896 = vadd.f32 %v892, %v895
      %vm897 = vweird.f32 %v820
      %vm898 = vweird.f32 %v892
      %vm899 = vmor %vm897, %vm898
      %v900 = vsel %vm899, %v892, %v896
      %v901 = vand.u32 2147483647, %v820
      %vm902 = vcmp.eq.f32.partialorder %v901, 8.507059e+37
      %v903 = vand.u32 %v820, 2147483648
      %v904 = vor.u32 1.1754944e-38, %v903
      %v905 = vsel %vm902, %v904, %v900
      %v906 = vmul.f32 %v757, %v905
      %v907 = vrcp.pop %v821
      %v908 = vmul.f32 %v821, %v907
      %v909 = vsub.f32 1.0, %v908
      %v910 = vmul.f32 %v907, %v909
      %v911 = vadd.f32 %v907, %v910
      %vm912 = vweird.f32 %v821
      %vm913 = vweird.f32 %v907
      %vm914 = vmor %vm912, %vm913
      %v915 = vsel %vm914, %v907, %v911
      %v916 = vand.u32 2147483647, %v821
      %vm917 = vcmp.eq.f32.partialorder %v916, 8.507059e+37
      %v918 = vand.u32 %v821, 2147483648
      %v919 = vor.u32 1.1754944e-38, %v918
      %v920 = vsel %vm917, %v919, %v915
      %v921 = vmul.f32 %v759, %v920
      %v922 = vrcp.pop %v822
      %v923 = vmul.f32 %v822, %v922
      %v924 = vsub.f32 1.0, %v923
      %v925 = vmul.f32 %v922, %v924
      %v926 = vadd.f32 %v922, %v925
      %vm927 = vweird.f32 %v822
      %vm928 = vweird.f32 %v922
      %vm929 = vmor %vm927, %vm928
      %v930 = vsel %vm929, %v922, %v926
      %v931 = vand.u32 2147483647, %v822
      %vm932 = vcmp.eq.f32.partialorder %v931, 8.507059e+37
      %v933 = vand.u32 %v822, 2147483648
      %v934 = vor.u32 1.1754944e-38, %v933
      %v935 = vsel %vm932, %v934, %v930
      %v936 = vmul.f32 %v761, %v935
      %v937 = vrcp.pop %v823
      %v938 = vmul.f32 %v823, %v937
      %v939 = vsub.f32 1.0, %v938
      %v940 = vmul.f32 %v937, %v939
      %v941 = vadd.f32 %v937, %v940
      %vm942 = vweird.f32 %v823
      %vm943 = vweird.f32 %v937
      %vm944 = vmor %vm942, %vm943
      %v945 = vsel %vm944, %v937, %v941
      %v946 = vand.u32 2147483647, %v823
      %vm947 = vcmp.eq.f32.partialorder %v946, 8.507059e+37
      %v948 = vand.u32 %v823, 2147483648
      %v949 = vor.u32 1.1754944e-38, %v948
      %v950 = vsel %vm947, %v949, %v945
      %v951 = vmul.f32 %v763, %v950
      %953 = vset.pattern.permute.xlu0 0
      %954 = vperm.xlu0 %953, %v846
      %v955 = vpop.permute.xlu0 %954
      %958 = vset.pattern.permute.xlu0 0
      %959 = vperm.xlu0 %958, %v861
      %v960 = vpop.permute.xlu0 %959
      %963 = vset.pattern.permute.xlu0 0
      %964 = vperm.xlu0 %963, %v876
      %v965 = vpop.permute.xlu0 %964
      %968 = vset.pattern.permute.xlu0 0
      %969 = vperm.xlu0 %968, %v891
      %v970 = vpop.permute.xlu0 %969
      %973 = vset.pattern.permute.xlu0 0
      %974 = vperm.xlu0 %973, %v906
      %v975 = vpop.permute.xlu0 %974
      %978 = vset.pattern.permute.xlu0 0
      %979 = vperm.xlu0 %978, %v921
      %v980 = vpop.permute.xlu0 %979
      %983 = vset.pattern.permute.xlu0 0
      %984 = vperm.xlu0 %983, %v936
      %v985 = vpop.permute.xlu0 %984
      %988 = vset.pattern.permute.xlu0 0
      %989 = vperm.xlu0 %988, %v951
      %v990 = vpop.permute.xlu0 %989
      %v992 = vmul.f32 %v955, %v588
      %v993 = vmul.f32 %v960, %v589
      %v994 = vmul.f32 %v965, %v590
      %v995 = vmul.f32 %v970, %v591
      %v996 = vmul.f32 %v975, %v592
      %v997 = vmul.f32 %v980, %v593
      %v998 = vmul.f32 %v985, %v594
      %v999 = vmul.f32 %v990, %v595
      %v1000 = vrot.slane %v992, 4
      %v1001 = vadd.f32 %v992, %v1000
      %v1002 = vrot.slane %v1001, 2
      %v1003 = vadd.f32 %v1001, %v1002
      %v1004 = vrot.slane %v1003, 1
      %v1005 = vadd.f32 %v1003, %v1004
      %v1006 = vrot.slane %v993, 4
      %v1007 = vadd.f32 %v993, %v1006
      %v1008 = vrot.slane %v1007, 2
      %v1009 = vadd.f32 %v1007, %v1008
      %v1010 = vrot.slane %v1009, 1
      %v1011 = vadd.f32 %v1009, %v1010
      %v1012 = vrot.slane %v994, 4
      %v1013 = vadd.f32 %v994, %v1012
      %v1014 = vrot.slane %v1013, 2
      %v1015 = vadd.f32 %v1013, %v1014
      %v1016 = vrot.slane %v1015, 1
      %v1017 = vadd.f32 %v1015, %v1016
      %v1018 = vrot.slane %v995, 4
      %v1019 = vadd.f32 %v995, %v1018
      %v1020 = vrot.slane %v1019, 2
      %v1021 = vadd.f32 %v1019, %v1020
      %v1022 = vrot.slane %v1021, 1
      %v1023 = vadd.f32 %v1021, %v1022
      %v1024 = vrot.slane %v996, 4
      %v1025 = vadd.f32 %v996, %v1024
      %v1026 = vrot.slane %v1025, 2
      %v1027 = vadd.f32 %v1025, %v1026
      %v1028 = vrot.slane %v1027, 1
      %v1029 = vadd.f32 %v1027, %v1028
      %v1030 = vrot.slane %v997, 4
      %v1031 = vadd.f32 %v997, %v1030
      %v1032 = vrot.slane %v1031, 2
      %v1033 = vadd.f32 %v1031, %v1032
      %v1034 = vrot.slane %v1033, 1
      %v1035 = vadd.f32 %v1033, %v1034
      %v1036 = vrot.slane %v998, 4
      %v1037 = vadd.f32 %v998, %v1036
      %v1038 = vrot.slane %v1037, 2
      %v1039 = vadd.f32 %v1037, %v1038
      %v1040 = vrot.slane %v1039, 1
      %v1041 = vadd.f32 %v1039, %v1040
      %v1042 = vrot.slane %v999, 4
      %v1043 = vadd.f32 %v999, %v1042
      %v1044 = vrot.slane %v1043, 2
      %v1045 = vadd.f32 %v1043, %v1044
      %v1046 = vrot.slane %v1045, 1
      %v1047 = vadd.f32 %v1045, %v1046
      %v1048 = vpack.c.bf16 %v578, %v578
      %v1049 = vld [vmem:[%s8] sm:$0xf]
      %v1050 = vld [vmem:[%s8 + $0x4] sm:$0xf]
      %v1051 = vld [vmem:[%s8 + $0x8] sm:$0xf]
      %v1052 = vld [vmem:[%s8 + $0xc] sm:$0xf]
      %v1053 = vld [vmem:[%s8 + $0x10] sm:$0xf]
      %v1054 = vld [vmem:[%s8 + $0x14] sm:$0xf]
      %v1055 = vld [vmem:[%s8 + $0x18] sm:$0xf]
      %v1056 = vld [vmem:[%s8 + $0x1c] sm:$0xf]
      %v1057 = vld [vmem:[%s8 + $0x20] sm:$0xf]
      %v1058 = vld [vmem:[%s8 + $0x24] sm:$0xf]
      %v1059 = vld [vmem:[%s8 + $0x28] sm:$0xf]
      %v1060 = vld [vmem:[%s8 + $0x2c] sm:$0xf]
      %v1061 = vld [vmem:[%s8 + $0x30] sm:$0xf]
      %v1062 = vld [vmem:[%s8 + $0x34] sm:$0xf]
      %v1063 = vld [vmem:[%s8 + $0x38] sm:$0xf]
      %v1064 = vld [vmem:[%s8 + $0x3c] sm:$0xf]
      %v1065 = vpack.c.bf16 %v1005, %v1005
      %v1066 = vpack.c.bf16 %v1011, %v1011
      %v1067 = vpack.c.bf16 %v1017, %v1017
      %v1068 = vpack.c.bf16 %v1023, %v1023
      %v1069 = vpack.c.bf16 %v1029, %v1029
      %v1070 = vpack.c.bf16 %v1035, %v1035
      %v1071 = vpack.c.bf16 %v1041, %v1041
      %v1072 = vpack.c.bf16 %v1047, %v1047
      %v1073 = vld [vmem:[#allocation7] sm:$0xf]
      %v1074 = vld [vmem:[#allocation7 + $0x4] sm:$0xf]
      %v1075 = vld [vmem:[#allocation7 + $0x8] sm:$0xf]
      %v1076 = vld [vmem:[#allocation7 + $0xc] sm:$0xf]
      %v1077 = vld [vmem:[#allocation7 + $0x10] sm:$0xf]
      %v1078 = vld [vmem:[#allocation7 + $0x14] sm:$0xf]
      %v1079 = vld [vmem:[#allocation7 + $0x18] sm:$0xf]
      %v1080 = vld [vmem:[#allocation7 + $0x1c] sm:$0xf]
      %v1081 = vld [vmem:[#allocation7 + $0x20] sm:$0xf]
      %v1082 = vld [vmem:[#allocation7 + $0x24] sm:$0xf]
      %v1083 = vld [vmem:[#allocation7 + $0x28] sm:$0xf]
      %v1084 = vld [vmem:[#allocation7 + $0x2c] sm:$0xf]
      %v1085 = vld [vmem:[#allocation7 + $0x30] sm:$0xf]
      %v1086 = vld [vmem:[#allocation7 + $0x34] sm:$0xf]
      %v1087 = vld [vmem:[#allocation7 + $0x38] sm:$0xf]
      %v1088 = vld [vmem:[#allocation7 + $0x3c] sm:$0xf]
      %v1097 = vunpack.c.l.b16 %v1065
      %v1098 = vunpack.c.l.b16 %v1066
      %v1099 = vunpack.c.l.b16 %v1067
      %v1100 = vunpack.c.l.b16 %v1068
      %v1101 = vunpack.c.l.b16 %v1069
      %v1102 = vunpack.c.l.b16 %v1070
      %v1103 = vunpack.c.l.b16 %v1071
      %v1104 = vunpack.c.l.b16 %v1072
      %v1105 = vsel %vm704, %v1098, %v1097
      %v1106 = vsel %vm706, %v1099, %v1105
      %v1107 = vsel %vm708, %v1100, %v1106
      %v1108 = vsel %vm710, %v1101, %v1107
      %v1109 = vsel %vm712, %v1102, %v1108
      %v1110 = vsel %vm714, %v1103, %v1109
      %v1111 = vsel %vm716, %v1104, %v1110
      %v1112 = vpack.c.b16 %v1111, %v1111
      %v1130 = vunpack.c.l.b16 %v1073
      %v1131 = vunpack.c.l.b16 %v1074
      %v1132 = vunpack.c.l.b16 %v1075
      %v1133 = vunpack.c.l.b16 %v1076
      %v1134 = vunpack.c.l.b16 %v1077
      %v1135 = vunpack.c.l.b16 %v1078
      %v1136 = vunpack.c.l.b16 %v1079
      %v1137 = vunpack.c.l.b16 %v1080
      %v1138 = vunpack.c.l.b16 %v1081
      %v1139 = vunpack.c.l.b16 %v1082
      %v1140 = vunpack.c.l.b16 %v1083
      %v1141 = vunpack.c.l.b16 %v1084
      %v1142 = vunpack.c.l.b16 %v1085
      %v1143 = vunpack.c.l.b16 %v1086
      %v1144 = vunpack.c.l.b16 %v1087
      %v1145 = vunpack.c.l.b16 %v1088
      %v1146 = vpack.c.b16 %v1131, %v1130
      %v1147 = vpack.c.b16 %v1133, %v1132
      %v1148 = vpack.c.b16 %v1135, %v1134
      %v1149 = vpack.c.b16 %v1137, %v1136
      %v1150 = vpack.c.b16 %v1139, %v1138
      %v1151 = vpack.c.b16 %v1141, %v1140
      %v1152 = vpack.c.b16 %v1143, %v1142
      %v1153 = vpack.c.b16 %v1145, %v1144
      %1162 = vmatpush.bf16.msra.mxu0 %v1153
      %1163 = vmatpush.bf16.msra.mxu0 %v1152
      %1164 = vmatpush.bf16.msra.mxu0 %v1151
      %1165 = vmatpush.bf16.msra.mxu0 %v1150
      %1166 = vmatpush.bf16.msra.mxu0 %v1149
      %1167 = vmatpush.bf16.msra.mxu0 %v1148
      %1168 = vmatpush.bf16.msra.mxu0 %v1147
      %1169 = vmatpush.bf16.msra.mxu0 %v1146
      %1170 = vmatmul.bf16.gmra.mxu0 %v1112
      %v1171 = vpop.f32.mrf.mxu0
      %v1172 = vadd.f32 0.0, %v1171
      %v1173 = vpop.f32.mrf.mxu0
      %1174 = vdwg.mxu0
      %v1191 = vunpack.c.l.b16 %v1049
      %v1192 = vunpack.c.l.b16 %v1050
      %v1193 = vunpack.c.l.b16 %v1051
      %v1194 = vunpack.c.l.b16 %v1052
      %v1195 = vunpack.c.l.b16 %v1053
      %v1196 = vunpack.c.l.b16 %v1054
      %v1197 = vunpack.c.l.b16 %v1055
      %v1198 = vunpack.c.l.b16 %v1056
      %v1199 = vunpack.c.l.b16 %v1057
      %v1200 = vunpack.c.l.b16 %v1058
      %v1201 = vunpack.c.l.b16 %v1059
      %v1202 = vunpack.c.l.b16 %v1060
      %v1203 = vunpack.c.l.b16 %v1061
      %v1204 = vunpack.c.l.b16 %v1062
      %v1205 = vunpack.c.l.b16 %v1063
      %v1206 = vunpack.c.l.b16 %v1064
      %v1207 = vpack.c.b16 %v1192, %v1191
      %v1208 = vpack.c.b16 %v1194, %v1193
      %v1209 = vpack.c.b16 %v1196, %v1195
      %v1210 = vpack.c.b16 %v1198, %v1197
      %v1211 = vpack.c.b16 %v1200, %v1199
      %v1212 = vpack.c.b16 %v1202, %v1201
      %v1213 = vpack.c.b16 %v1204, %v1203
      %v1214 = vpack.c.b16 %v1206, %v1205
      %1223 = vmatpush.bf16.msra.mxu0 %v1214
      %1224 = vmatpush.bf16.msra.mxu0 %v1213
      %1225 = vmatpush.bf16.msra.mxu0 %v1212
      %1226 = vmatpush.bf16.msra.mxu0 %v1211
      %1227 = vmatpush.bf16.msra.mxu0 %v1210
      %1228 = vmatpush.bf16.msra.mxu0 %v1209
      %1229 = vmatpush.bf16.msra.mxu0 %v1208
      %1230 = vmatpush.bf16.msra.mxu0 %v1207
      %1231 = vmatmul.bf16.gmra.mxu0 %v1048
      %v1232 = vpop.f32.mrf.mxu0
      %v1233 = vadd.f32 %v1172, %v1232
      %v1234 = vpop.f32.mrf.mxu0
      %1235 = vdwg.mxu0
      %v1236 = vld [vmem:[%s10] sm:$0x1]
      %v1238 = vperm.slane %v1236, 0
      %v1240 = vadd.f32 %v1233, %v1238
      %v1241 = vtanh.pop %v1240
      %v1242 = vpack.c.bf16 %v1241, %v1241
      %1243 = vst [vmem:[#allocation2] sm:$0xf] %v1242
    $region73: #{luong_attn_decoder_forward.1} parent=1 // pred_fallthru
      _
    %v1244 = vld [vmem:[#allocation2] sm:$0xf]
    %v1245 = vld [vmem:[#allocation8] sm:$0xf]
    %v1246 = vld [vmem:[#allocation8 + $0x4] sm:$0xf]
    %v1247 = vld [vmem:[#allocation8 + $0x8] sm:$0xf]
    %v1248 = vld [vmem:[#allocation8 + $0xc] sm:$0xf]
    %v1249 = vld [vmem:[#allocation8 + $0x10] sm:$0xf]
    %v1250 = vld [vmem:[#allocation8 + $0x14] sm:$0xf]
    %v1251 = vld [vmem:[#allocation8 + $0x18] sm:$0xf]
    %v1252 = vld [vmem:[#allocation8 + $0x1c] sm:$0xf]
    %v1253 = vld [vmem:[#allocation8 + $0x20] sm:$0xf]
    %v1254 = vld [vmem:[#allocation8 + $0x24] sm:$0xf]
    %v1255 = vld [vmem:[#allocation8 + $0x28] sm:$0xf]
    %v1256 = vld [vmem:[#allocation8 + $0x2c] sm:$0xf]
    %v1257 = vld [vmem:[#allocation8 + $0x30] sm:$0xf]
    %v1258 = vld [vmem:[#allocation8 + $0x34] sm:$0xf]
    %v1259 = vld [vmem:[#allocation8 + $0x38] sm:$0xf]
    %v1260 = vld [vmem:[#allocation8 + $0x3c] sm:$0xf]
    %v1261 = vld [vmem:[%s12] sm:$0x1]
    %v1263 = vperm.slane %v1261, 0
    %v1281 = vunpack.c.l.b16 %v1245
    %v1282 = vunpack.c.l.b16 %v1246
    %v1283 = vunpack.c.l.b16 %v1247
    %v1284 = vunpack.c.l.b16 %v1248
    %v1285 = vunpack.c.l.b16 %v1249
    %v1286 = vunpack.c.l.b16 %v1250
    %v1287 = vunpack.c.l.b16 %v1251
    %v1288 = vunpack.c.l.b16 %v1252
    %v1289 = vunpack.c.l.b16 %v1253
    %v1290 = vunpack.c.l.b16 %v1254
    %v1291 = vunpack.c.l.b16 %v1255
    %v1292 = vunpack.c.l.b16 %v1256
    %v1293 = vunpack.c.l.b16 %v1257
    %v1294 = vunpack.c.l.b16 %v1258
    %v1295 = vunpack.c.l.b16 %v1259
    %v1296 = vunpack.c.l.b16 %v1260
    %v1297 = vpack.c.b16 %v1282, %v1281
    %v1298 = vpack.c.b16 %v1284, %v1283
    %v1299 = vpack.c.b16 %v1286, %v1285
    %v1300 = vpack.c.b16 %v1288, %v1287
    %v1301 = vpack.c.b16 %v1290, %v1289
    %v1302 = vpack.c.b16 %v1292, %v1291
    %v1303 = vpack.c.b16 %v1294, %v1293
    %v1304 = vpack.c.b16 %v1296, %v1295
    %1313 = vmatpush.bf16.msra.mxu0 %v1304
    %1314 = vmatpush.bf16.msra.mxu0 %v1303
    %1315 = vmatpush.bf16.msra.mxu0 %v1302
    %1316 = vmatpush.bf16.msra.mxu0 %v1301
    %1317 = vmatpush.bf16.msra.mxu0 %v1300
    %1318 = vmatpush.bf16.msra.mxu0 %v1299
    %1319 = vmatpush.bf16.msra.mxu0 %v1298
    %1320 = vmatpush.bf16.msra.mxu0 %v1297
    %1321 = vmatmul.bf16.gmra.mxu0 %v1244
    %v1322 = vpop.f32.mrf.mxu0
    %v1323 = vadd.f32 %v1263, %v1322
    %v1324 = vpop.f32.mrf.mxu0
    %1325 = vdwg.mxu0
    %1326 = vmax.xlane.f32.xlu0 %v1323
    %v1327 = vpop.xlane.xlu0 %1326
    %v1328 = vsub.f32 %v1323, %v1327
    %v1329 = vmul.f32 %v1328, 1.442695
    %v1330 = vpow.pop %v1329
    %1331 = vst [vmem:[%s13] sm:$0xff] %v1330
    %1332 = vst [vmem:[%s14] sm:$0xff] %v1327
    // Predicated region
    $region74: #{luong_attn_decoder_forward.1} parent=1 // pred_check
      _
    $region75: #{luong_attn_decoder_forward.1} parent=1 // pred_check_branch
      %1334 = sbr.rel (0) target = $region77
    $region76: #{luong_attn_decoder_forward.1} parent=1 // pred_region
      _
    $region77: #{luong_attn_decoder_forward.1} parent=1 // pred_fallthru
      _
    // Predicated region
    $region78: #{luong_attn_decoder_forward.1} parent=1 // pred_check
      _
    $region79: #{luong_attn_decoder_forward.1} parent=1 // pred_check_branch
      %1336 = sbr.rel (0) target = $region81
    $region80: #{luong_attn_decoder_forward.1} parent=1 // pred_region
      _
    $region81: #{luong_attn_decoder_forward.1} parent=1 // pred_fallthru
      _
    // Predicated region
    $region82: #{luong_attn_decoder_forward.1} parent=1 // pred_check
      _
    $region83: #{luong_attn_decoder_forward.1} parent=1 // pred_check_branch
      %1338 = sbr.rel (0) target = $region85
    $region84: #{luong_attn_decoder_forward.1} parent=1 // pred_region
      _
    $region85: #{luong_attn_decoder_forward.1} parent=1 // pred_fallthru
      _
    // Predicated region
    $region86: #{luong_attn_decoder_forward.1} parent=1 // pred_check
      _
    $region87: #{luong_attn_decoder_forward.1} parent=1 // pred_check_branch
      %1340 = sbr.rel (0) target = $region89
    $region88: #{luong_attn_decoder_forward.1} parent=1 // pred_region
      _
    $region89: #{luong_attn_decoder_forward.1} parent=1 // pred_fallthru
      _
    // Predicated region
    $region90: #{luong_attn_decoder_forward.1} parent=1 // pred_check
      _
    $region91: #{luong_attn_decoder_forward.1} parent=1 // pred_check_branch
      %1342 = sbr.rel (0) target = $region93
    $region92: #{luong_attn_decoder_forward.1} parent=1 // pred_region
      _
    $region93: #{luong_attn_decoder_forward.1} parent=1 // pred_fallthru
      _
    // Predicated region
    $region94: #{luong_attn_decoder_forward.1} parent=1 // pred_check
      _
    $region95: #{luong_attn_decoder_forward.1} parent=1 // pred_check_branch
      %1344 = sbr.rel (0) target = $region97
    $region96: #{luong_attn_decoder_forward.1} parent=1 // pred_region
      _
    $region97: #{luong_attn_decoder_forward.1} parent=1 // pred_fallthru
      _
    %1345 = vsyncpa [#allocation4], 1
    %1346 = vsyncpa [#allocation6], 1
    %1347 = vsyncpa [#allocation9], 1

</llo_original>
